<compile_context>
chip_gen: v6e
topology: v6e:2x2x1
jax: 0.10.0
libtpu: 0.0.40
codegen_flags: <defaults>
</compile_context>

<pallas_src>
import math

import jax
import jax.numpy as jnp
from jax.experimental import pallas as pl
from jax.experimental.pallas import tpu as pltpu

_SQRT_HALF = 0.7071067811865476
_MATMUL_DTYPE = jnp.bfloat16      # MXU operand dtype (f32 accumulation everywhere)


def _erf(x):
    # Abramowitz & Stegun 7.1.26 polynomial (|err| < 1.5e-7, ~f32 precision);
    # erf has no direct Mosaic primitive. Elementwise ops + one exp only.
    p = 0.3275911
    a1, a2, a3, a4, a5 = (0.254829592, -0.284496736, 1.421413741,
                          -1.453152027, 1.061405429)
    ax = jnp.abs(x)
    t = pl.reciprocal(1.0 + p * ax)                # exact reciprocal (non-approx)
    poly = ((((a5 * t + a4) * t + a3) * t + a2) * t + a1) * t
    y = 1.0 - poly * jnp.exp(-ax * ax)
    return jnp.where(x >= 0.0, y, -y)


def _gelu_exact(x):
    # PyTorch nn.GELU() default (erf-based, not tanh approximation).
    return 0.5 * x * (1.0 + _erf(x * _SQRT_HALF))


def _mlp(z, ln_g, ln_b, w1, b1, w2, b2, compute_dtype):
    """LayerNorm([C]) (biased var, eps=1e-5) -> Linear -> GELU -> Linear."""
    mu = jnp.mean(z, axis=-1, keepdims=True)
    var = jnp.mean(jnp.square(z - mu), axis=-1, keepdims=True)
    zn = (z - mu) * jax.lax.rsqrt(var + 1e-5)
    zn = zn * ln_g + ln_b
    h = jnp.dot(zn.astype(compute_dtype), w1,
                preferred_element_type=jnp.float32) + b1
    h = _gelu_exact(h)
    return jnp.dot(h.astype(compute_dtype), w2,
                   preferred_element_type=jnp.float32) + b2


def _make_proj_kernel(C, compute_dtype):
    def kernel(x_ref, ln_g, ln_b, w1, b1, w2, b2, wq, bq, wk, bk, wv, bv,
               q_ref, kv_ref):
        # x tile arrives channel-major (C, tb): transpose on the XLU (the
        # NCHW -> token-major layout change is folded into the kernel).
        x = x_ref[...].T                                            # (tb, C) f32
        y = _mlp(x, ln_g[...], ln_b[...], w1[...], b1[...], w2[...], b2[...],
                 compute_dtype)
        yc = y.astype(compute_dtype)
        # Three separate full-K (=C) matmuls: never materializes a (tb, 3C) f32
        # value.  1/sqrt(head_dim) is folded into wq/bq in the wrapper.
        q = jnp.dot(yc, wq[...], preferred_element_type=jnp.float32) + bq[...]
        q_ref[...] = q.astype(q_ref.dtype)
        k = jnp.dot(yc, wk[...], preferred_element_type=jnp.float32) + bk[...]
        v = jnp.dot(yc, wv[...], preferred_element_type=jnp.float32) + bv[...]
        # Packed K|V: one wide lane-dense store; one DMA stream for pass 2.
        kv_ref[...] = jnp.concatenate(
            [k.astype(kv_ref.dtype), v.astype(kv_ref.dtype)], axis=-1)

    return kernel


def _make_attn_kernel(C, heads, compute_dtype):
    hd = C // heads

    def kernel(q_ref, kv_ref, x_ref,
               ln_g, ln_b, w1, b1, w2, b2, wo, bo,
               out_ref, m_sc, l_sc, acc_sc):
        ki = pl.program_id(2)

        @pl.when(ki == 0)
        def _():
            m_sc[...] = jnp.full(m_sc.shape, -jnp.inf, jnp.float32)
            l_sc[...] = jnp.zeros(l_sc.shape, jnp.float32)
            acc_sc[...] = jnp.zeros(acc_sc.shape, jnp.float32)

        q = q_ref[...]                      # (tq, C)  bf16, scale pre-folded
        kv = kv_ref[...]                    # (tk, 2C) bf16 (K | V packed)
        acc_prev = acc_sc[...]              # (tq, C)  f32 lane-dense accumulator

        # Online softmax, statically unrolled over heads.  The score / PV
        # matmuls are inherently K=head_dim; the accumulator stays (tq, C) so
        # the epilogue output projection is one full-C contraction.
        new_cols = []
        for h in range(heads):
            lo = h * hd
            q_h = q[:, lo:lo + hd]
            k_h = kv[:, lo:lo + hd]
            v_h = kv[:, C + lo:C + lo + hd]
            s = jax.lax.dot_general(q_h, k_h, (((1,), (1,)), ((), ())),
                                    preferred_element_type=jnp.float32)  # (tq, tk)
            m_prev = m_sc[h]
            m_new = jnp.maximum(m_prev, jnp.max(s, axis=-1, keepdims=True))
            alpha = jnp.exp(m_prev - m_new)
            # TODO(synk): on v6e/v7x a bf16 exp here roughly doubles EUP
            # throughput; kept f32 for v5e support and exactness.
            p = jnp.exp(s - m_new)
            l_sc[h] = alpha * l_sc[h] + jnp.sum(p, axis=-1, keepdims=True)
            pv = jnp.dot(p.astype(compute_dtype), v_h,
                         preferred_element_type=jnp.float32)
            new_cols.append(alpha * acc_prev[:, lo:lo + hd] + pv)
            m_sc[h] = m_new
        # One wide lane-dense accumulator store per KV step.
        acc_sc[...] = jnp.concatenate(new_cols, axis=-1)

        @pl.when(ki == pl.num_programs(2) - 1)
        def _():
            # Per-head softmax normalization (VPU only), then ONE full-C
            # output projection (head concat already folded into Wo^T rows).
            acc_v = acc_sc[...]
            ctx = jnp.concatenate(
                [acc_v[:, h * hd:(h + 1) * hd]
                 * pl.reciprocal(l_sc[h], approx=True) for h in range(heads)],
                axis=-1)
            attn = jnp.dot(ctx.astype(compute_dtype), wo[...],
                           preferred_element_type=jnp.float32) + bo[...]
            a = attn + x_ref[...].T                             # residual, (tq, C)
            out = _mlp(a, ln_g[...], ln_b[...], w1[...], b1[...], w2[...],
                       b2[...], compute_dtype) + a
            # Store directly in (C, tq) layout; lane-dense when tq % 128 == 0.
            out_ref[...] = out.T.astype(out_ref.dtype)

    return kernel


def _vmem_limit_bytes():
    # Generation-aware VMEM budget: ~75% of physical VMEM, capped at 100 MiB
    # (v5e/v6e have 128 MiB; v7x only 64 MiB).
    try:
        cap = int(pltpu.get_tpu_info().vmem_capacity_bytes)
    except Exception:
        cap = 64 * 1024 * 1024
    return int(max(32 * 1024 * 1024, min(int(cap * 0.75), 100 * 1024 * 1024)))


def _select_tiles(S, C, vmem_limit):
    """Token-tile sizes derived from C and the per-generation VMEM budget.

    Pass-1 footprint ~ 2x resident bf16 weights (5 CxC matrices) + ~44*C B/token.
    Pass-2 footprint ~ 2x resident bf16 weights (3 CxC) + ~48*C B/query-token
                       + ~12*C B/kv-token + ~12*tq*tk B (f32 score/prob tiles).
    Layout constraints (x / out kept in (B, C, S) layout, token axis in lanes):
    tb and tq must be multiples of 128 or the full S; tk (kv is token-major,
    sublane axis) only needs to be a multiple of 8 or the full S.
    """
    budget = max(int(vmem_limit * 0.6), 8 << 20)

    def lane_candidates(cap):
        if S <= 128:
            return [S]
        cands = [d for d in range(128, min(S, cap) + 1, 128) if S % d == 0]
        return cands if cands else [S]

    def sublane_candidates(cap):
        if S <= cap:
            return [S]
        cands = [d for d in range(8, cap + 1, 8) if S % d == 0]
        return cands if cands else [S]

    # Pass 1: streaming matmuls — take the biggest tile that fits the budget.
    tb_cands = lane_candidates(1024)
    tb = tb_cands[0]
    for t in tb_cands:
        if 20 * C * C + 44 * C * t <= budget:
            tb = t

    # Pass 2: prefer a large tq (KV HBM re-streaming ~ S/tq), shrink tk first.
    tq_cands = lane_candidates(512)
    tk_cands = sublane_candidates(512)
    tq, tk = tq_cands[0], tk_cands[0]
    best = None
    for q_ in tq_cands:
        for k_ in tk_cands:
            if 12 * C * C + 48 * C * q_ + 12 * C * k_ + 12 * q_ * k_ <= budget:
                if best is None or (q_, k_) > best:
                    best = (q_, k_)
    if best is not None:
        tq, tk = best
    return tb, tq, tk


def init_params(key, channels):
    C = channels
    ks = jax.random.split(key, 10)
    n = lambda k, shape, s=0.1: jax.random.normal(k, shape, jnp.float32) * s
    return dict(
        ln_g=jnp.ones((C,), jnp.float32) + n(ks[0], (C,), 0.05),
        ln_b=n(ks[1], (C,), 0.05),
        w1=n(ks[2], (C, C)),          # PyTorch Linear weight layout (out, in)
        b1=n(ks[3], (C,), 0.02),
        w2=n(ks[4], (C, C)),
        b2=n(ks[5], (C,), 0.02),
        in_proj_w=n(ks[6], (3 * C, C)),
        in_proj_b=n(ks[7], (3 * C,), 0.02),
        out_proj_w=n(ks[8], (C, C)),
        out_proj_b=n(ks[9], (C,), 0.02),
    )


def self_attention_forward(x_nchw, params, heads=4):
    B, C, Hs, Ws = x_nchw.shape
    S = Hs * Ws
    assert C % heads == 0
    hd = C // heads
    scale = 1.0 / math.sqrt(hd)
    cdt = _MATMUL_DTYPE

    # NCHW -> (B, C, S) is a pure reshape; the (channel, token) -> (token,
    # channel) transpose is folded into the kernels (in-kernel XLU transpose).
    x = x_nchw.reshape(B, C, S).astype(jnp.float32)

    # PyTorch Linear computes z @ W.T + b; pre-transpose once in the wrapper.
    ln_g = params["ln_g"].reshape(1, C).astype(jnp.float32)
    ln_b = params["ln_b"].reshape(1, C).astype(jnp.float32)
    w1 = params["w1"].T.astype(cdt)
    b1 = params["b1"].reshape(1, C).astype(jnp.float32)
    w2 = params["w2"].T.astype(cdt)
    b2 = params["b2"].reshape(1, C).astype(jnp.float32)

    wq, wk, wv = jnp.split(params["in_proj_w"], 3, axis=0)        # (C, C) each
    bq, bk, bv = jnp.split(params["in_proj_b"], 3)
    # 1/sqrt(head_dim) folded into the Q projection (weight AND bias).
    wq_t = (wq.T * scale).astype(cdt)
    wk_t = wk.T.astype(cdt)
    wv_t = wv.T.astype(cdt)
    bq_s = (bq * scale).reshape(1, C).astype(jnp.float32)
    bk_r = bk.reshape(1, C).astype(jnp.float32)
    bv_r = bv.reshape(1, C).astype(jnp.float32)

    wo = params["out_proj_w"].T.astype(cdt)                       # (C, C)
    bo = params["out_proj_b"].reshape(1, C).astype(jnp.float32)

    vmem_limit = _vmem_limit_bytes()
    tb, tq, tk = _select_tiles(S, C, vmem_limit)

    # ---------------- pass 1: MLP + Q / packed-K|V projection ----------------
    x_spec1 = pl.BlockSpec((None, C, tb), lambda b, t: (b, 0, t))
    vec_c1 = pl.BlockSpec((1, C), lambda b, t: (0, 0))
    mat_cc1 = pl.BlockSpec((C, C), lambda b, t: (0, 0))
    q_spec1 = pl.BlockSpec((None, tb, C), lambda b, t: (b, t, 0))
    kv_spec1 = pl.BlockSpec((None, tb, 2 * C), lambda b, t: (b, t, 0))

    cost_a = pl.CostEstimate(
        flops=int(10 * B * S * C * C),
        transcendentals=int(B * S * C),
        bytes_accessed=int(B * S * C * 4 + 3 * B * S * C * 2 + 5 * C * C * 2),
    )

    q, kv = pl.pallas_call(
        _make_proj_kernel(C, cdt),
        out_shape=(jax.ShapeDtypeStruct((B, S, C), cdt),
                   jax.ShapeDtypeStruct((B, S, 2 * C), cdt)),
        grid=(B, S // tb),
        in_specs=[x_spec1, vec_c1, vec_c1, mat_cc1, vec_c1, mat_cc1, vec_c1,
                  mat_cc1, vec_c1, mat_cc1, vec_c1, mat_cc1, vec_c1],
        out_specs=(q_spec1, kv_spec1),
        compiler_params=pltpu.CompilerParams(
            dimension_semantics=("parallel", "parallel"),
            vmem_limit_bytes=vmem_limit),
        cost_estimate=cost_a,
    )(x, ln_g, ln_b, w1, b1, w2, b2, wq_t, bq_s, wk_t, bk_r, wv_t, bv_r)

    # ---------- pass 2: flash attention + residual + MLP epilogue -----------
    nq, nk = S // tq, S // tk
    q_spec = pl.BlockSpec((None, tq, C), lambda b, qi, ki: (b, qi, 0))
    kv_spec = pl.BlockSpec((None, tk, 2 * C), lambda b, qi, ki: (b, ki, 0))
    x_spec2 = pl.BlockSpec((None, C, tq), lambda b, qi, ki: (b, 0, qi))
    vec_c2 = pl.BlockSpec((1, C), lambda b, qi, ki: (0, 0))
    mat_cc2 = pl.BlockSpec((C, C), lambda b, qi, ki: (0, 0))
    out_spec = pl.BlockSpec((None, C, tq), lambda b, qi, ki: (b, 0, qi))

    cost_b = pl.CostEstimate(
        flops=int(B * (4 * S * S * C + 6 * S * C * C)),
        transcendentals=int(B * (heads * S * S + S * C)),
        bytes_accessed=int(B * S * C * 2 + B * nq * S * 2 * C * 2
                           + 2 * B * S * C * 4 + 3 * C * C * 2),
    )

    out = pl.pallas_call(
        _make_attn_kernel(C, heads, cdt),
        out_shape=jax.ShapeDtypeStruct((B, C, S), jnp.float32),
        grid=(B, nq, nk),
        in_specs=[q_spec, kv_spec, x_spec2,
                  vec_c2, vec_c2, mat_cc2, vec_c2, mat_cc2, vec_c2,
                  mat_cc2, vec_c2],
        out_specs=out_spec,
        scratch_shapes=[
            pltpu.VMEM((heads, tq, 1), jnp.float32),    # running max (per head)
            pltpu.VMEM((heads, tq, 1), jnp.float32),    # running denominator
            pltpu.VMEM((tq, C), jnp.float32),           # lane-dense running context
        ],
        compiler_params=pltpu.CompilerParams(
            dimension_semantics=("parallel", "parallel", "arbitrary"),
            vmem_limit_bytes=vmem_limit),
        cost_estimate=cost_b,
    )(q, kv, x, ln_g, ln_b, w1, b1, w2, b2, wo, bo)

    # Output already in (B, C, S) layout — pure reshape back to NCHW.
    return out.reshape(B, C, Hs, Ws)


if __name__ == "__main__":
    B, C, size, heads = 2, 8, 8, 4
    key = jax.random.PRNGKey(0)
    k_x, k_p = jax.random.split(key)
    x = jax.random.normal(k_x, (B, C, size, size), jnp.float32)
    params = init_params(k_p, C)

    out = self_attention_forward(x, params, heads=heads)
    jax.block_until_ready(out)
    assert out.shape == (B, C, size, size)
    assert bool(jnp.all(jnp.isfinite(out)))
    print("KERNEL_OK")
</pallas_src>

<mosaic_0001>
module attributes {stable_mosaic.version = 11 : i64} {
  func.func @kernel(%arg0: i32, %arg1: i32, %arg2: memref<1x8x64xf32, #tpu.memory_space<vmem>>, %arg3: memref<1x8xf32, #tpu.memory_space<vmem>>, %arg4: memref<1x8xf32, #tpu.memory_space<vmem>>, %arg5: memref<8x8xbf16, #tpu.memory_space<vmem>>, %arg6: memref<1x8xf32, #tpu.memory_space<vmem>>, %arg7: memref<8x8xbf16, #tpu.memory_space<vmem>>, %arg8: memref<1x8xf32, #tpu.memory_space<vmem>>, %arg9: memref<8x8xbf16, #tpu.memory_space<vmem>>, %arg10: memref<1x8xf32, #tpu.memory_space<vmem>>, %arg11: memref<8x8xbf16, #tpu.memory_space<vmem>>, %arg12: memref<1x8xf32, #tpu.memory_space<vmem>>, %arg13: memref<8x8xbf16, #tpu.memory_space<vmem>>, %arg14: memref<1x8xf32, #tpu.memory_space<vmem>>, %arg15: memref<1x64x8xbf16, #tpu.memory_space<vmem>>, %arg16: memref<1x64x16xbf16, #tpu.memory_space<vmem>>) attributes {dimension_semantics = [#tpu.dimension_semantics<parallel>, #tpu.dimension_semantics<parallel>], iteration_bounds = array<i64: 2, 1>, scalar_prefetch = 0 : i64, scratch_operands = 0 : i64, tpu.core_type = #tpu.core_type<tc>, window_params = [{transform_indices = @transform_0, window_bounds = array<i64: 1, 8, 64>}, {pipeline_mode = #tpu.pipeline_mode<synchronous>, transform_indices = @transform_1, window_bounds = array<i64: 1, 8>}, {pipeline_mode = #tpu.pipeline_mode<synchronous>, transform_indices = @transform_2, window_bounds = array<i64: 1, 8>}, {pipeline_mode = #tpu.pipeline_mode<synchronous>, transform_indices = @transform_3, window_bounds = array<i64: 8, 8>}, {pipeline_mode = #tpu.pipeline_mode<synchronous>, transform_indices = @transform_4, window_bounds = array<i64: 1, 8>}, {pipeline_mode = #tpu.pipeline_mode<synchronous>, transform_indices = @transform_5, window_bounds = array<i64: 8, 8>}, {pipeline_mode = #tpu.pipeline_mode<synchronous>, transform_indices = @transform_6, window_bounds = array<i64: 1, 8>}, {pipeline_mode = #tpu.pipeline_mode<synchronous>, transform_indices = @transform_7, window_bounds = array<i64: 8, 8>}, {pipeline_mode = #tpu.pipeline_mode<synchronous>, transform_indices = @transform_8, window_bounds = array<i64: 1, 8>}, {pipeline_mode = #tpu.pipeline_mode<synchronous>, transform_indices = @transform_9, window_bounds = array<i64: 8, 8>}, {pipeline_mode = #tpu.pipeline_mode<synchronous>, transform_indices = @transform_10, window_bounds = array<i64: 1, 8>}, {pipeline_mode = #tpu.pipeline_mode<synchronous>, transform_indices = @transform_11, window_bounds = array<i64: 8, 8>}, {pipeline_mode = #tpu.pipeline_mode<synchronous>, transform_indices = @transform_12, window_bounds = array<i64: 1, 8>}, {transform_indices = @transform_13, window_bounds = array<i64: 1, 64, 8>}, {transform_indices = @transform_14, window_bounds = array<i64: 1, 64, 16>}]} {
    %c0 = arith.constant 0 : index
    %c0_0 = arith.constant 0 : index
    %c0_1 = arith.constant 0 : index
    %0 = vector.load %arg2[%c0, %c0_0, %c0_1] : memref<1x8x64xf32, #tpu.memory_space<vmem>>, vector<1x8x64xf32>
    %1 = vector.shape_cast %0 : vector<1x8x64xf32> to vector<8x64xf32>
    %2 = tpu.transpose %1, [1, 0] : vector<8x64xf32> -> vector<64x8xf32>
    %c0_2 = arith.constant 0 : index
    %c0_3 = arith.constant 0 : index
    %3 = vector.load %arg3[%c0_2, %c0_3] : memref<1x8xf32, #tpu.memory_space<vmem>>, vector<1x8xf32>
    %c0_4 = arith.constant 0 : index
    %c0_5 = arith.constant 0 : index
    %4 = vector.load %arg4[%c0_4, %c0_5] : memref<1x8xf32, #tpu.memory_space<vmem>>, vector<1x8xf32>
    %c0_6 = arith.constant 0 : index
    %c0_7 = arith.constant 0 : index
    %5 = vector.load %arg5[%c0_6, %c0_7] : memref<8x8xbf16, #tpu.memory_space<vmem>>, vector<8x8xbf16>
    %c0_8 = arith.constant 0 : index
    %c0_9 = arith.constant 0 : index
    %6 = vector.load %arg6[%c0_8, %c0_9] : memref<1x8xf32, #tpu.memory_space<vmem>>, vector<1x8xf32>
    %c0_10 = arith.constant 0 : index
    %c0_11 = arith.constant 0 : index
    %7 = vector.load %arg7[%c0_10, %c0_11] : memref<8x8xbf16, #tpu.memory_space<vmem>>, vector<8x8xbf16>
    %c0_12 = arith.constant 0 : index
    %c0_13 = arith.constant 0 : index
    %8 = vector.load %arg8[%c0_12, %c0_13] : memref<1x8xf32, #tpu.memory_space<vmem>>, vector<1x8xf32>
    %cst = arith.constant dense<0.000000e+00> : vector<64xf32>
    %9 = vector.multi_reduction <add>, %2, %cst [1] : vector<64x8xf32> to vector<64xf32>
    %10 = vector.shape_cast %9 : vector<64xf32> to vector<64x1xf32>
    %cst_14 = arith.constant 8.000000e+00 : f32
    %11 = vector.broadcast %cst_14 : f32 to vector<64x1xf32>
    %12 = arith.divf %10, %11 : vector<64x1xf32>
    %13 = vector.broadcast %12 : vector<64x1xf32> to vector<64x8xf32>
    %14 = arith.subf %2, %13 : vector<64x8xf32>
    %15 = arith.mulf %14, %14 : vector<64x8xf32>
    %cst_15 = arith.constant dense<0.000000e+00> : vector<64xf32>
    %16 = vector.multi_reduction <add>, %15, %cst_15 [1] : vector<64x8xf32> to vector<64xf32>
    %17 = vector.shape_cast %16 : vector<64xf32> to vector<64x1xf32>
    %cst_16 = arith.constant 8.000000e+00 : f32
    %18 = vector.broadcast %cst_16 : f32 to vector<64x1xf32>
    %19 = arith.divf %17, %18 : vector<64x1xf32>
    %20 = vector.broadcast %12 : vector<64x1xf32> to vector<64x8xf32>
    %21 = arith.subf %2, %20 : vector<64x8xf32>
    %cst_17 = arith.constant 9.99999974E-6 : f32
    %22 = vector.broadcast %cst_17 : f32 to vector<64x1xf32>
    %23 = arith.addf %19, %22 : vector<64x1xf32>
    %24 = math.rsqrt %23 : vector<64x1xf32>
    %25 = vector.broadcast %24 : vector<64x1xf32> to vector<64x8xf32>
    %26 = arith.mulf %21, %25 : vector<64x8xf32>
    %27 = vector.broadcast %3 : vector<1x8xf32> to vector<64x8xf32>
    %28 = arith.mulf %26, %27 : vector<64x8xf32>
    %29 = vector.broadcast %4 : vector<1x8xf32> to vector<64x8xf32>
    %30 = arith.addf %28, %29 : vector<64x8xf32>
    %31 = arith.truncf %30 : vector<64x8xf32> to vector<64x8xbf16>
    %cst_18 = arith.constant dense<0.000000e+00> : vector<64x8xf32>
    %32 = tpu.matmul %31, %5, %cst_18 {dimension_numbers = #tpu.dot_dimension_numbers<[1], [0], [0], [1], [0, 0, 1, 1], [], []>} : vector<64x8xbf16>, vector<8x8xbf16>, vector<64x8xf32> -> vector<64x8xf32>
    %33 = vector.broadcast %6 : vector<1x8xf32> to vector<64x8xf32>
    %34 = arith.addf %32, %33 : vector<64x8xf32>
    %cst_19 = arith.constant 5.000000e-01 : f32
    %35 = vector.broadcast %cst_19 : f32 to vector<64x8xf32>
    %36 = arith.mulf %35, %34 : vector<64x8xf32>
    %cst_20 = arith.constant 0.707106769 : f32
    %37 = vector.broadcast %cst_20 : f32 to vector<64x8xf32>
    %38 = arith.mulf %34, %37 : vector<64x8xf32>
    %39 = math.absf %38 : vector<64x8xf32>
    %cst_21 = arith.constant 0.327591091 : f32
    %40 = vector.broadcast %cst_21 : f32 to vector<64x8xf32>
    %41 = arith.mulf %40, %39 : vector<64x8xf32>
    %cst_22 = arith.constant 1.000000e+00 : f32
    %42 = vector.broadcast %cst_22 : f32 to vector<64x8xf32>
    %43 = arith.addf %42, %41 : vector<64x8xf32>
    %44 = tpu.reciprocal %43 : vector<64x8xf32> -> vector<64x8xf32>
    %cst_23 = arith.constant 1.06140542 : f32
    %45 = vector.broadcast %cst_23 : f32 to vector<64x8xf32>
    %46 = arith.mulf %45, %44 : vector<64x8xf32>
    %cst_24 = arith.constant -1.45315206 : f32
    %47 = vector.broadcast %cst_24 : f32 to vector<64x8xf32>
    %48 = arith.addf %46, %47 : vector<64x8xf32>
    %49 = arith.mulf %48, %44 : vector<64x8xf32>
    %cst_25 = arith.constant 1.42141378 : f32
    %50 = vector.broadcast %cst_25 : f32 to vector<64x8xf32>
    %51 = arith.addf %49, %50 : vector<64x8xf32>
    %52 = arith.mulf %51, %44 : vector<64x8xf32>
    %cst_26 = arith.constant -0.284496725 : f32
    %53 = vector.broadcast %cst_26 : f32 to vector<64x8xf32>
    %54 = arith.addf %52, %53 : vector<64x8xf32>
    %55 = arith.mulf %54, %44 : vector<64x8xf32>
    %cst_27 = arith.constant 0.254829586 : f32
    %56 = vector.broadcast %cst_27 : f32 to vector<64x8xf32>
    %57 = arith.addf %55, %56 : vector<64x8xf32>
    %58 = arith.mulf %57, %44 : vector<64x8xf32>
    %cst_28 = arith.constant 0.000000e+00 : f32
    %59 = vector.broadcast %cst_28 : f32 to vector<64x8xf32>
    %60 = arith.subf %59, %39 : vector<64x8xf32>
    %61 = arith.mulf %60, %39 : vector<64x8xf32>
    %62 = math.exp %61 : vector<64x8xf32>
    %63 = arith.mulf %58, %62 : vector<64x8xf32>
    %cst_29 = arith.constant 1.000000e+00 : f32
    %64 = vector.broadcast %cst_29 : f32 to vector<64x8xf32>
    %65 = arith.subf %64, %63 : vector<64x8xf32>
    %cst_30 = arith.constant 0.000000e+00 : f32
    %66 = vector.broadcast %cst_30 : f32 to vector<64x8xf32>
    %67 = arith.cmpf oge, %38, %66 : vector<64x8xf32>
    %cst_31 = arith.constant 0.000000e+00 : f32
    %68 = vector.broadcast %cst_31 : f32 to vector<64x8xf32>
    %69 = arith.subf %68, %65 : vector<64x8xf32>
    %70 = arith.select %67, %65, %69 : vector<64x8xi1>, vector<64x8xf32>
    %cst_32 = arith.constant 1.000000e+00 : f32
    %71 = vector.broadcast %cst_32 : f32 to vector<64x8xf32>
    %72 = arith.addf %71, %70 : vector<64x8xf32>
    %73 = arith.mulf %36, %72 : vector<64x8xf32>
    %74 = arith.truncf %73 : vector<64x8xf32> to vector<64x8xbf16>
    %cst_33 = arith.constant dense<0.000000e+00> : vector<64x8xf32>
    %75 = tpu.matmul %74, %7, %cst_33 {dimension_numbers = #tpu.dot_dimension_numbers<[1], [0], [0], [1], [0, 0, 1, 1], [], []>} : vector<64x8xbf16>, vector<8x8xbf16>, vector<64x8xf32> -> vector<64x8xf32>
    %76 = vector.broadcast %8 : vector<1x8xf32> to vector<64x8xf32>
    %77 = arith.addf %75, %76 : vector<64x8xf32>
    %78 = arith.truncf %77 : vector<64x8xf32> to vector<64x8xbf16>
    %c0_34 = arith.constant 0 : index
    %c0_35 = arith.constant 0 : index
    %79 = vector.load %arg9[%c0_34, %c0_35] : memref<8x8xbf16, #tpu.memory_space<vmem>>, vector<8x8xbf16>
    %cst_36 = arith.constant dense<0.000000e+00> : vector<64x8xf32>
    %80 = tpu.matmul %78, %79, %cst_36 {dimension_numbers = #tpu.dot_dimension_numbers<[1], [0], [0], [1], [0, 0, 1, 1], [], []>} : vector<64x8xbf16>, vector<8x8xbf16>, vector<64x8xf32> -> vector<64x8xf32>
    %c0_37 = arith.constant 0 : index
    %c0_38 = arith.constant 0 : index
    %81 = vector.load %arg10[%c0_37, %c0_38] : memref<1x8xf32, #tpu.memory_space<vmem>>, vector<1x8xf32>
    %82 = vector.broadcast %81 : vector<1x8xf32> to vector<64x8xf32>
    %83 = arith.addf %80, %82 : vector<64x8xf32>
    %84 = arith.truncf %83 : vector<64x8xf32> to vector<64x8xbf16>
    %c0_39 = arith.constant 0 : index
    %c0_40 = arith.constant 0 : index
    %c0_41 = arith.constant 0 : index
    %85 = vector.load %arg15[%c0_39, %c0_40, %c0_41] : memref<1x64x8xbf16, #tpu.memory_space<vmem>>, vector<1x64x8xbf16>
    %86 = vector.shape_cast %85 : vector<1x64x8xbf16> to vector<64x8xbf16>
    %87 = vector.shape_cast %84 : vector<64x8xbf16> to vector<1x64x8xbf16>
    tpu.vector_store %arg15[%c0_39, %c0_40, %c0_41], %87 {strides = array<i32>} : memref<1x64x8xbf16, #tpu.memory_space<vmem>>, vector<1x64x8xbf16>,
    %c0_42 = arith.constant 0 : index
    %c0_43 = arith.constant 0 : index
    %88 = vector.load %arg11[%c0_42, %c0_43] : memref<8x8xbf16, #tpu.memory_space<vmem>>, vector<8x8xbf16>
    %cst_44 = arith.constant dense<0.000000e+00> : vector<64x8xf32>
    %89 = tpu.matmul %78, %88, %cst_44 {dimension_numbers = #tpu.dot_dimension_numbers<[1], [0], [0], [1], [0, 0, 1, 1], [], []>} : vector<64x8xbf16>, vector<8x8xbf16>, vector<64x8xf32> -> vector<64x8xf32>
    %c0_45 = arith.constant 0 : index
    %c0_46 = arith.constant 0 : index
    %90 = vector.load %arg12[%c0_45, %c0_46] : memref<1x8xf32, #tpu.memory_space<vmem>>, vector<1x8xf32>
    %91 = vector.broadcast %90 : vector<1x8xf32> to vector<64x8xf32>
    %92 = arith.addf %89, %91 : vector<64x8xf32>
    %c0_47 = arith.constant 0 : index
    %c0_48 = arith.constant 0 : index
    %93 = vector.load %arg13[%c0_47, %c0_48] : memref<8x8xbf16, #tpu.memory_space<vmem>>, vector<8x8xbf16>
    %cst_49 = arith.constant dense<0.000000e+00> : vector<64x8xf32>
    %94 = tpu.matmul %78, %93, %cst_49 {dimension_numbers = #tpu.dot_dimension_numbers<[1], [0], [0], [1], [0, 0, 1, 1], [], []>} : vector<64x8xbf16>, vector<8x8xbf16>, vector<64x8xf32> -> vector<64x8xf32>
    %c0_50 = arith.constant 0 : index
    %c0_51 = arith.constant 0 : index
    %95 = vector.load %arg14[%c0_50, %c0_51] : memref<1x8xf32, #tpu.memory_space<vmem>>, vector<1x8xf32>
    %96 = vector.broadcast %95 : vector<1x8xf32> to vector<64x8xf32>
    %97 = arith.addf %94, %96 : vector<64x8xf32>
    %98 = arith.truncf %92 : vector<64x8xf32> to vector<64x8xbf16>
    %99 = arith.truncf %97 : vector<64x8xf32> to vector<64x8xbf16>
    %100 = tpu.concatenate %98, %99 in 1 : vector<64x8xbf16>, vector<64x8xbf16> -> vector<64x16xbf16>
    %c0_52 = arith.constant 0 : index
    %c0_53 = arith.constant 0 : index
    %c0_54 = arith.constant 0 : index
    %101 = vector.load %arg16[%c0_52, %c0_53, %c0_54] : memref<1x64x16xbf16, #tpu.memory_space<vmem>>, vector<1x64x16xbf16>
    %102 = vector.shape_cast %101 : vector<1x64x16xbf16> to vector<64x16xbf16>
    %103 = vector.shape_cast %100 : vector<64x16xbf16> to vector<1x64x16xbf16>
    tpu.vector_store %arg16[%c0_52, %c0_53, %c0_54], %103 {strides = array<i32>} : memref<1x64x16xbf16, #tpu.memory_space<vmem>>, vector<1x64x16xbf16>,
    return
  }
  func.func @transform_0(%arg0: i32, %arg1: i32) -> (i32, i32, i32) {
    %c0_i32 = arith.constant 0 : i32
    %c0_i32_0 = arith.constant 0 : i32
    return %arg0, %c0_i32, %arg1 : i32, i32, i32
  }
  func.func @transform_1(%arg0: i32, %arg1: i32) -> (i32, i32) {
    %c0_i32 = arith.constant 0 : i32
    %c0_i32_0 = arith.constant 0 : i32
    %c0_i32_1 = arith.constant 0 : i32
    return %c0_i32, %c0_i32_0 : i32, i32
  }
  func.func @transform_2(%arg0: i32, %arg1: i32) -> (i32, i32) {
    %c0_i32 = arith.constant 0 : i32
    %c0_i32_0 = arith.constant 0 : i32
    %c0_i32_1 = arith.constant 0 : i32
    return %c0_i32, %c0_i32_0 : i32, i32
  }
  func.func @transform_3(%arg0: i32, %arg1: i32) -> (i32, i32) {
    %c0_i32 = arith.constant 0 : i32
    %c0_i32_0 = arith.constant 0 : i32
    %c0_i32_1 = arith.constant 0 : i32
    return %c0_i32, %c0_i32_0 : i32, i32
  }
  func.func @transform_4(%arg0: i32, %arg1: i32) -> (i32, i32) {
    %c0_i32 = arith.constant 0 : i32
    %c0_i32_0 = arith.constant 0 : i32
    %c0_i32_1 = arith.constant 0 : i32
    return %c0_i32, %c0_i32_0 : i32, i32
  }
  func.func @transform_5(%arg0: i32, %arg1: i32) -> (i32, i32) {
    %c0_i32 = arith.constant 0 : i32
    %c0_i32_0 = arith.constant 0 : i32
    %c0_i32_1 = arith.constant 0 : i32
    return %c0_i32, %c0_i32_0 : i32, i32
  }
  func.func @transform_6(%arg0: i32, %arg1: i32) -> (i32, i32) {
    %c0_i32 = arith.constant 0 : i32
    %c0_i32_0 = arith.constant 0 : i32
    %c0_i32_1 = arith.constant 0 : i32
    return %c0_i32, %c0_i32_0 : i32, i32
  }
  func.func @transform_7(%arg0: i32, %arg1: i32) -> (i32, i32) {
    %c0_i32 = arith.constant 0 : i32
    %c0_i32_0 = arith.constant 0 : i32
    %c0_i32_1 = arith.constant 0 : i32
    return %c0_i32, %c0_i32_0 : i32, i32
  }
  func.func @transform_8(%arg0: i32, %arg1: i32) -> (i32, i32) {
    %c0_i32 = arith.constant 0 : i32
    %c0_i32_0 = arith.constant 0 : i32
    %c0_i32_1 = arith.constant 0 : i32
    return %c0_i32, %c0_i32_0 : i32, i32
  }
  func.func @transform_9(%arg0: i32, %arg1: i32) -> (i32, i32) {
    %c0_i32 = arith.constant 0 : i32
    %c0_i32_0 = arith.constant 0 : i32
    %c0_i32_1 = arith.constant 0 : i32
    return %c0_i32, %c0_i32_0 : i32, i32
  }
  func.func @transform_10(%arg0: i32, %arg1: i32) -> (i32, i32) {
    %c0_i32 = arith.constant 0 : i32
    %c0_i32_0 = arith.constant 0 : i32
    %c0_i32_1 = arith.constant 0 : i32
    return %c0_i32, %c0_i32_0 : i32, i32
  }
  func.func @transform_11(%arg0: i32, %arg1: i32) -> (i32, i32) {
    %c0_i32 = arith.constant 0 : i32
    %c0_i32_0 = arith.constant 0 : i32
    %c0_i32_1 = arith.constant 0 : i32
    return %c0_i32, %c0_i32_0 : i32, i32
  }
  func.func @transform_12(%arg0: i32, %arg1: i32) -> (i32, i32) {
    %c0_i32 = arith.constant 0 : i32
    %c0_i32_0 = arith.constant 0 : i32
    %c0_i32_1 = arith.constant 0 : i32
    return %c0_i32, %c0_i32_0 : i32, i32
  }
  func.func @transform_13(%arg0: i32, %arg1: i32) -> (i32, i32, i32) {
    %c0_i32 = arith.constant 0 : i32
    %c0_i32_0 = arith.constant 0 : i32
    return %arg0, %arg1, %c0_i32 : i32, i32, i32
  }
  func.func @transform_14(%arg0: i32, %arg1: i32) -> (i32, i32, i32) {
    %c0_i32 = arith.constant 0 : i32
    %c0_i32_0 = arith.constant 0 : i32
    return %arg0, %arg1, %c0_i32 : i32, i32, i32
  }
}

</mosaic_0001>

<llo_original>
// kernel: tpu_custom_call.1
$region0: #{tpu_custom_call.1}
  #allocation0 [shape = 'u32[]', space=smem, size = 0x4, offset = 0x4, fixed_abs, tag = 'smem constant byte address 0x4 - core index']
  #allocation1 [shape = 'u32[144,128]{1,0:T(1,128)}', space=vmem, size = 0x12000, scoped, tag = 'internal scratch']
  %s0 = inlined_call_operand.hbm [shape: f32[2,8,64], index: 0, kind: input, shape index: {}]
  %s1 = inlined_call_operand.hbm [shape: f32[1,8], index: 1, kind: input, shape index: {}]
  %s2 = inlined_call_operand.hbm [shape: f32[1,8], index: 2, kind: input, shape index: {}]
  %s3 = inlined_call_operand.vmem [shape: bf16[8,8], index: 3, kind: input, shape index: {}]
  %s4 = inlined_call_operand.hbm [shape: f32[1,8], index: 4, kind: input, shape index: {}]
  %s5 = inlined_call_operand.vmem [shape: bf16[8,8], index: 5, kind: input, shape index: {}]
  %s6 = inlined_call_operand.hbm [shape: f32[1,8], index: 6, kind: input, shape index: {}]
  %s7 = inlined_call_operand.vmem [shape: bf16[8,8], index: 7, kind: input, shape index: {}]
  %s8 = inlined_call_operand.hbm [shape: f32[1,8], index: 8, kind: input, shape index: {}]
  %s9 = inlined_call_operand.vmem [shape: bf16[8,8], index: 9, kind: input, shape index: {}]
  %s10 = inlined_call_operand.hbm [shape: f32[1,8], index: 10, kind: input, shape index: {}]
  %s11 = inlined_call_operand.vmem [shape: bf16[8,8], index: 11, kind: input, shape index: {}]
  %s12 = inlined_call_operand.vmem [shape: f32[1,8], index: 12, kind: input, shape index: {}]
  %s13 = inlined_call_operand.vmem [shape: bf16[2,64,8], index: 13, kind: output, shape index: {0}]
  %s14 = inlined_call_operand.vmem [shape: bf16[2,64,16], index: 14, kind: output, shape index: {1}]
  %15 = xla_tuple %s13, %s14
  %s16 = sld [smem:[#allocation0]]
  $region121: #{tpu_custom_call.1} parent=0
    _
  %s18 = ssub.s32 1, %s16
  %s19 = scalar_select 0, %s18, %s16
  $region1: #{tpu_custom_call.1} parent=0
    #allocation2 [shape = 'u8[8192]{0}', space=vmem, size = 0x2000, scoped, tag = 'input window, operand 0']
    #allocation3 [shape = 's32[2]{0}', space=sflag, size = 0x8, scoped, tag = 'scoped memory for tpu_custom_call.1']
    #allocation4 [shape = 'u8[512]{0}', space=vmem, size = 0x400, scoped, tag = 'input window, operand 1, single buffered']
    #allocation5 [shape = 's32[1]{0}', space=sflag, size = 0x4, scoped, tag = 'scoped memory for tpu_custom_call.1']
    #allocation6 [shape = 'u8[512]{0}', space=vmem, size = 0x400, scoped, tag = 'input window, operand 2, single buffered']
    #allocation7 [shape = 'u8[512]{0}', space=vmem, size = 0x400, scoped, tag = 'input window, operand 4, single buffered']
    #allocation8 [shape = 's32[1]{0}', space=sflag, size = 0x4, scoped, tag = 'scoped memory for tpu_custom_call.1']
    #allocation9 [shape = 'u8[512]{0}', space=vmem, size = 0x400, scoped, tag = 'input window, operand 6, single buffered']
    #allocation10 [shape = 'u8[512]{0}', space=vmem, size = 0x400, scoped, tag = 'input window, operand 8, single buffered']
    #allocation11 [shape = 's32[1]{0}', space=sflag, size = 0x4, scoped, tag = 'scoped memory for tpu_custom_call.1']
    #allocation12 [shape = 'u8[512]{0}', space=vmem, size = 0x400, scoped, tag = 'input window, operand 10, single buffered']
    %20 = vsyncpa [#allocation3], 0
    %s21 = scalar_lea.sflag [#allocation3], 1
    %22 = vsyncpa %s21, 0
    %23 = vsyncpa [#allocation5], 0
    %24 = vsyncpa [#allocation8], 0
    %25 = vsyncpa [#allocation11], 0
    loop: start=0, step=1, limit=4
    $region2: #{tpu_custom_call.1} parent=1 // loop_pre_header
      _
    $region3: #{tpu_custom_call.1} parent=1 // loop_header
      %s27 = sphi 0, %s31
      %p28 = scmp.ge.s32.totalorder %s27, 4
      %s34 = sphi 0, %s46
      %s35 = sphi 0, %s42
      %s36 = sphi 0, %s34
      %s37 = sphi 0, %s35
      %s38 = sphi 0, %s36
      %s39 = sphi 0, %s37
      %s51 = sphi 0, %s53
      %s54 = sphi 0, %s51
      %s55 = sphi 0, %s54
      %s71 = sphi 0, %s55
      %s75 = sphi 0, %s75
      %s77 = sphi 0, %s75
      %s78 = sphi 0, %s77
      %s92 = sphi 0, %s78
      %s96 = sphi 0, %s96
      %s98 = sphi 0, %s96
      %s99 = sphi 0, %s98
      %s113 = sphi 0, %s99
      %s117 = sphi 0, %s117
      %s119 = sphi 0, %s117
      %s120 = sphi 0, %s119
      %s134 = sphi 0, %s120
      %s138 = sphi 0, %s138
      %s140 = sphi 0, %s138
      %s141 = sphi 0, %s140
      %s155 = sphi 0, %s141
      %s159 = sphi 0, %s159
      %s161 = sphi 0, %s159
      %s162 = sphi 0, %s161
      %s176 = sphi 0, %s162
      %s180 = sphi 0, %s180
      %s182 = sphi 0, %s180
      %s183 = sphi 0, %s182
      %s197 = sphi 0, %s183
      %s201 = sphi 0, %s201
      %s203 = sphi 0, %s201
      %s204 = sphi 0, %s203
      %s218 = sphi 0, %s204
      %s222 = sphi 0, %s222
      %s224 = sphi 0, %s222
      %s225 = sphi 0, %s224
      %s239 = sphi 0, %s225
      %s243 = sphi 0, %s243
      %s245 = sphi 0, %s243
      %s246 = sphi 0, %s245
      %s260 = sphi 0, %s246
      %s264 = sphi 0, %s264
      %s266 = sphi 0, %s264
      %s267 = sphi 0, %s266
      %s281 = sphi 0, %s267
      %s285 = sphi 0, %s285
      %s287 = sphi 0, %s285
      %s288 = sphi 0, %s287
      %s302 = sphi 0, %s288
      %s306 = sphi 0, %s306
      %s308 = sphi 0, %s306
      %s309 = sphi 0, %s308
      %s323 = sphi 0, %s309
      %s331 = sphi 0, %s333
      %s334 = sphi 0, %s331
      %s335 = sphi 0, %s334
      %s351 = sphi 0, %s335
      %s359 = sphi 0, %s361
      %s362 = sphi 0, %s359
      %s363 = sphi 0, %s362
      %s379 = sphi 0, %s363
    $region4: #{tpu_custom_call.1} parent=1 // loop_header_branch
      %30 = sbr.rel (%p28) target = $region8
    $region5: #{tpu_custom_call.1} parent=1 // loop_body
      %s32 = ssub.s32 %s27, 1
      %s33 = ssub.s32 %s27, 2
      %s40 = sadd.s32 1, %s35
      %p41 = scmp.ge.s32.totalorder %s40, 1
      %s42 = scalar_select %p41, 0, %s40
      %s43 = sadd.s32 1, %s34
      %s44 = scalar_select %p41, %s43, %s34
      %p45 = scmp.ge.s32.totalorder %s44, 2
      %s46 = scalar_select %p45, 0, %s44
      %s47 = ssub.s32 %s34, %s46
      %s48 = ssub.s32 %s35, %s42
      %s49 = sor.u32 %s47, %s48
      %p50 = scmp.eq.s32.totalorder %s49, 0
      %s52 = sadd.s32 %s51, 1
      %s53 = scalar_select %p50, %s51, %s52
      %p56 = pneg %p50
      %p57 = scmp.eq.s32.totalorder %s27, 1
      %p58 = por %p56, %p57
      %p59 = scmp.ne.s32.totalorder %s51, %s54
      %p60 = scmp.eq.s32.totalorder %s27, 0
      %p61 = por %p59, %p60
      %p62 = scmp.ne.s32.totalorder %s51, %s54
      %p63 = scmp.eq.s32.totalorder %s32, 1
      %p64 = por %p62, %p63
      %p65 = scmp.ne.s32.totalorder %s54, %s55
      %p66 = scmp.eq.s32.totalorder %s32, 0
      %p67 = por %p65, %p66
      %p68 = scmp.ne.s32.totalorder %s54, %s55
      %p69 = scmp.eq.s32.totalorder %s33, 1
      %p70 = por %p68, %p69
      %p72 = scmp.ne.s32.totalorder %s55, %s71
      %p73 = scmp.eq.s32.totalorder %s33, 0
      %p74 = por %p72, %p73
      %s76 = sadd.s32 %s75, 1
      %p79 = scmp.eq.s32.totalorder %s27, 1
      %p80 = scmp.ne.s32.totalorder %s75, %s77
      %p81 = scmp.eq.s32.totalorder %s27, 0
      %p82 = por %p80, %p81
      %p83 = scmp.ne.s32.totalorder %s75, %s77
      %p84 = scmp.eq.s32.totalorder %s32, 1
      %p85 = por %p83, %p84
      %p86 = scmp.ne.s32.totalorder %s77, %s78
      %p87 = scmp.eq.s32.totalorder %s32, 0
      %p88 = por %p86, %p87
      %p89 = scmp.ne.s32.totalorder %s77, %s78
      %p90 = scmp.eq.s32.totalorder %s33, 1
      %p91 = por %p89, %p90
      %p93 = scmp.ne.s32.totalorder %s78, %s92
      %p94 = scmp.eq.s32.totalorder %s33, 0
      %p95 = por %p93, %p94
      %s97 = sadd.s32 %s96, 1
      %p100 = scmp.eq.s32.totalorder %s27, 1
      %p101 = scmp.ne.s32.totalorder %s96, %s98
      %p102 = scmp.eq.s32.totalorder %s27, 0
      %p103 = por %p101, %p102
      %p104 = scmp.ne.s32.totalorder %s96, %s98
      %p105 = scmp.eq.s32.totalorder %s32, 1
      %p106 = por %p104, %p105
      %p107 = scmp.ne.s32.totalorder %s98, %s99
      %p108 = scmp.eq.s32.totalorder %s32, 0
      %p109 = por %p107, %p108
      %p110 = scmp.ne.s32.totalorder %s98, %s99
      %p111 = scmp.eq.s32.totalorder %s33, 1
      %p112 = por %p110, %p111
      %p114 = scmp.ne.s32.totalorder %s99, %s113
      %p115 = scmp.eq.s32.totalorder %s33, 0
      %p116 = por %p114, %p115
      %s118 = sadd.s32 %s117, 1
      %p121 = scmp.eq.s32.totalorder %s27, 1
      %p122 = scmp.ne.s32.totalorder %s117, %s119
      %p123 = scmp.eq.s32.totalorder %s27, 0
      %p124 = por %p122, %p123
      %p125 = scmp.ne.s32.totalorder %s117, %s119
      %p126 = scmp.eq.s32.totalorder %s32, 1
      %p127 = por %p125, %p126
      %p128 = scmp.ne.s32.totalorder %s119, %s120
      %p129 = scmp.eq.s32.totalorder %s32, 0
      %p130 = por %p128, %p129
      %p131 = scmp.ne.s32.totalorder %s119, %s120
      %p132 = scmp.eq.s32.totalorder %s33, 1
      %p133 = por %p131, %p132
      %p135 = scmp.ne.s32.totalorder %s120, %s134
      %p136 = scmp.eq.s32.totalorder %s33, 0
      %p137 = por %p135, %p136
      %s139 = sadd.s32 %s138, 1
      %p142 = scmp.eq.s32.totalorder %s27, 1
      %p143 = scmp.ne.s32.totalorder %s138, %s140
      %p144 = scmp.eq.s32.totalorder %s27, 0
      %p145 = por %p143, %p144
      %p146 = scmp.ne.s32.totalorder %s138, %s140
      %p147 = scmp.eq.s32.totalorder %s32, 1
      %p148 = por %p146, %p147
      %p149 = scmp.ne.s32.totalorder %s140, %s141
      %p150 = scmp.eq.s32.totalorder %s32, 0
      %p151 = por %p149, %p150
      %p152 = scmp.ne.s32.totalorder %s140, %s141
      %p153 = scmp.eq.s32.totalorder %s33, 1
      %p154 = por %p152, %p153
      %p156 = scmp.ne.s32.totalorder %s141, %s155
      %p157 = scmp.eq.s32.totalorder %s33, 0
      %p158 = por %p156, %p157
      %s160 = sadd.s32 %s159, 1
      %p163 = scmp.eq.s32.totalorder %s27, 1
      %p164 = scmp.ne.s32.totalorder %s159, %s161
      %p165 = scmp.eq.s32.totalorder %s27, 0
      %p166 = por %p164, %p165
      %p167 = scmp.ne.s32.totalorder %s159, %s161
      %p168 = scmp.eq.s32.totalorder %s32, 1
      %p169 = por %p167, %p168
      %p170 = scmp.ne.s32.totalorder %s161, %s162
      %p171 = scmp.eq.s32.totalorder %s32, 0
      %p172 = por %p170, %p171
      %p173 = scmp.ne.s32.totalorder %s161, %s162
      %p174 = scmp.eq.s32.totalorder %s33, 1
      %p175 = por %p173, %p174
      %p177 = scmp.ne.s32.totalorder %s162, %s176
      %p178 = scmp.eq.s32.totalorder %s33, 0
      %p179 = por %p177, %p178
      %s181 = sadd.s32 %s180, 1
      %p184 = scmp.eq.s32.totalorder %s27, 1
      %p185 = scmp.ne.s32.totalorder %s180, %s182
      %p186 = scmp.eq.s32.totalorder %s27, 0
      %p187 = por %p185, %p186
      %p188 = scmp.ne.s32.totalorder %s180, %s182
      %p189 = scmp.eq.s32.totalorder %s32, 1
      %p190 = por %p188, %p189
      %p191 = scmp.ne.s32.totalorder %s182, %s183
      %p192 = scmp.eq.s32.totalorder %s32, 0
      %p193 = por %p191, %p192
      %p194 = scmp.ne.s32.totalorder %s182, %s183
      %p195 = scmp.eq.s32.totalorder %s33, 1
      %p196 = por %p194, %p195
      %p198 = scmp.ne.s32.totalorder %s183, %s197
      %p199 = scmp.eq.s32.totalorder %s33, 0
      %p200 = por %p198, %p199
      %s202 = sadd.s32 %s201, 1
      %p205 = scmp.eq.s32.totalorder %s27, 1
      %p206 = scmp.ne.s32.totalorder %s201, %s203
      %p207 = scmp.eq.s32.totalorder %s27, 0
      %p208 = por %p206, %p207
      %p209 = scmp.ne.s32.totalorder %s201, %s203
      %p210 = scmp.eq.s32.totalorder %s32, 1
      %p211 = por %p209, %p210
      %p212 = scmp.ne.s32.totalorder %s203, %s204
      %p213 = scmp.eq.s32.totalorder %s32, 0
      %p214 = por %p212, %p213
      %p215 = scmp.ne.s32.totalorder %s203, %s204
      %p216 = scmp.eq.s32.totalorder %s33, 1
      %p217 = por %p215, %p216
      %p219 = scmp.ne.s32.totalorder %s204, %s218
      %p220 = scmp.eq.s32.totalorder %s33, 0
      %p221 = por %p219, %p220
      %s223 = sadd.s32 %s222, 1
      %p226 = scmp.eq.s32.totalorder %s27, 1
      %p227 = scmp.ne.s32.totalorder %s222, %s224
      %p228 = scmp.eq.s32.totalorder %s27, 0
      %p229 = por %p227, %p228
      %p230 = scmp.ne.s32.totalorder %s222, %s224
      %p231 = scmp.eq.s32.totalorder %s32, 1
      %p232 = por %p230, %p231
      %p233 = scmp.ne.s32.totalorder %s224, %s225
      %p234 = scmp.eq.s32.totalorder %s32, 0
      %p235 = por %p233, %p234
      %p236 = scmp.ne.s32.totalorder %s224, %s225
      %p237 = scmp.eq.s32.totalorder %s33, 1
      %p238 = por %p236, %p237
      %p240 = scmp.ne.s32.totalorder %s225, %s239
      %p241 = scmp.eq.s32.totalorder %s33, 0
      %p242 = por %p240, %p241
      %s244 = sadd.s32 %s243, 1
      %p247 = scmp.eq.s32.totalorder %s27, 1
      %p248 = scmp.ne.s32.totalorder %s243, %s245
      %p249 = scmp.eq.s32.totalorder %s27, 0
      %p250 = por %p248, %p249
      %p251 = scmp.ne.s32.totalorder %s243, %s245
      %p252 = scmp.eq.s32.totalorder %s32, 1
      %p253 = por %p251, %p252
      %p254 = scmp.ne.s32.totalorder %s245, %s246
      %p255 = scmp.eq.s32.totalorder %s32, 0
      %p256 = por %p254, %p255
      %p257 = scmp.ne.s32.totalorder %s245, %s246
      %p258 = scmp.eq.s32.totalorder %s33, 1
      %p259 = por %p257, %p258
      %p261 = scmp.ne.s32.totalorder %s246, %s260
      %p262 = scmp.eq.s32.totalorder %s33, 0
      %p263 = por %p261, %p262
      %s265 = sadd.s32 %s264, 1
      %p268 = scmp.eq.s32.totalorder %s27, 1
      %p269 = scmp.ne.s32.totalorder %s264, %s266
      %p270 = scmp.eq.s32.totalorder %s27, 0
      %p271 = por %p269, %p270
      %p272 = scmp.ne.s32.totalorder %s264, %s266
      %p273 = scmp.eq.s32.totalorder %s32, 1
      %p274 = por %p272, %p273
      %p275 = scmp.ne.s32.totalorder %s266, %s267
      %p276 = scmp.eq.s32.totalorder %s32, 0
      %p277 = por %p275, %p276
      %p278 = scmp.ne.s32.totalorder %s266, %s267
      %p279 = scmp.eq.s32.totalorder %s33, 1
      %p280 = por %p278, %p279
      %p282 = scmp.ne.s32.totalorder %s267, %s281
      %p283 = scmp.eq.s32.totalorder %s33, 0
      %p284 = por %p282, %p283
      %s286 = sadd.s32 %s285, 1
      %p289 = scmp.eq.s32.totalorder %s27, 1
      %p290 = scmp.ne.s32.totalorder %s285, %s287
      %p291 = scmp.eq.s32.totalorder %s27, 0
      %p292 = por %p290, %p291
      %p293 = scmp.ne.s32.totalorder %s285, %s287
      %p294 = scmp.eq.s32.totalorder %s32, 1
      %p295 = por %p293, %p294
      %p296 = scmp.ne.s32.totalorder %s287, %s288
      %p297 = scmp.eq.s32.totalorder %s32, 0
      %p298 = por %p296, %p297
      %p299 = scmp.ne.s32.totalorder %s287, %s288
      %p300 = scmp.eq.s32.totalorder %s33, 1
      %p301 = por %p299, %p300
      %p303 = scmp.ne.s32.totalorder %s288, %s302
      %p304 = scmp.eq.s32.totalorder %s33, 0
      %p305 = por %p303, %p304
      %s307 = sadd.s32 %s306, 1
      %p310 = scmp.eq.s32.totalorder %s27, 1
      %p311 = scmp.ne.s32.totalorder %s306, %s308
      %p312 = scmp.eq.s32.totalorder %s27, 0
      %p313 = por %p311, %p312
      %p314 = scmp.ne.s32.totalorder %s306, %s308
      %p315 = scmp.eq.s32.totalorder %s32, 1
      %p316 = por %p314, %p315
      %p317 = scmp.ne.s32.totalorder %s308, %s309
      %p318 = scmp.eq.s32.totalorder %s32, 0
      %p319 = por %p317, %p318
      %p320 = scmp.ne.s32.totalorder %s308, %s309
      %p321 = scmp.eq.s32.totalorder %s33, 1
      %p322 = por %p320, %p321
      %p324 = scmp.ne.s32.totalorder %s309, %s323
      %p325 = scmp.eq.s32.totalorder %s33, 0
      %p326 = por %p324, %p325
      %s327 = ssub.s32 %s34, %s46
      %s328 = ssub.s32 %s35, %s42
      %s329 = sor.u32 %s327, %s328
      %p330 = scmp.eq.s32.totalorder %s329, 0
      %s332 = sadd.s32 %s331, 1
      %s333 = scalar_select %p330, %s331, %s332
      %p336 = pneg %p330
      %p337 = scmp.eq.s32.totalorder %s27, 1
      %p338 = por %p336, %p337
      %p339 = scmp.ne.s32.totalorder %s331, %s334
      %p340 = scmp.eq.s32.totalorder %s27, 0
      %p341 = por %p339, %p340
      %p342 = scmp.ne.s32.totalorder %s331, %s334
      %p343 = scmp.eq.s32.totalorder %s32, 1
      %p344 = por %p342, %p343
      %p345 = scmp.ne.s32.totalorder %s334, %s335
      %p346 = scmp.eq.s32.totalorder %s32, 0
      %p347 = por %p345, %p346
      %p348 = scmp.ne.s32.totalorder %s334, %s335
      %p349 = scmp.eq.s32.totalorder %s33, 1
      %p350 = por %p348, %p349
      %p352 = scmp.ne.s32.totalorder %s335, %s351
      %p353 = scmp.eq.s32.totalorder %s33, 0
      %p354 = por %p352, %p353
      %s355 = ssub.s32 %s34, %s46
      %s356 = ssub.s32 %s35, %s42
      %s357 = sor.u32 %s355, %s356
      %p358 = scmp.eq.s32.totalorder %s357, 0
      %s360 = sadd.s32 %s359, 1
      %s361 = scalar_select %p358, %s359, %s360
      %p364 = pneg %p358
      %p365 = scmp.eq.s32.totalorder %s27, 1
      %p366 = por %p364, %p365
      %p367 = scmp.ne.s32.totalorder %s359, %s362
      %p368 = scmp.eq.s32.totalorder %s27, 0
      %p369 = por %p367, %p368
      %p370 = scmp.ne.s32.totalorder %s359, %s362
      %p371 = scmp.eq.s32.totalorder %s32, 1
      %p372 = por %p370, %p371
      %p373 = scmp.ne.s32.totalorder %s362, %s363
      %p374 = scmp.eq.s32.totalorder %s32, 0
      %p375 = por %p373, %p374
      %p376 = scmp.ne.s32.totalorder %s362, %s363
      %p377 = scmp.eq.s32.totalorder %s33, 1
      %p378 = por %p376, %p377
      %p380 = scmp.ne.s32.totalorder %s363, %s379
      %p381 = scmp.eq.s32.totalorder %s33, 0
      %p382 = por %p380, %p381
      %p383 = scmp.le.s32.totalorder 1, %s27
      %p384 = scmp.lt.s32.totalorder %s27, 3
      %p385 = pnand %p383, %p384
      %p386 = pneg %p385
      // Predicated region
      $region9: #{tpu_custom_call.1} parent=5 // pred_check
        _
      $region10: #{tpu_custom_call.1} parent=5 // pred_check_branch
        %388 = sbr.rel (%p385) target = $region12
      $region11: #{tpu_custom_call.1} parent=5 // pred_region
        %s389 = ssub.s32 %s27, 1
        // Predicated region
        $region13: #{tpu_custom_call.1} parent=11 // pred_check
          %p390 = pneg %p88
        $region14: #{tpu_custom_call.1} parent=11 // pred_check_branch
          %392 = sbr.rel (%p390) target = $region16
        $region15: #{tpu_custom_call.1} parent=11 // pred_region
          %s394 = ssub.s32 16, 16
          %395 = vsyncadd [#allocation5], %s394
          %s397 = sshll.u32 [#allocation4], 4
          %s398 = int_to_ptr.vmem [resolvable:$true] %s397
          %400 = dma.hbm_to_vmem [thread:$0]  %s1, 16, %s398, [#allocation5]
        $region16: #{tpu_custom_call.1} parent=11 // pred_fallthru
          _
        // Predicated region
        $region17: #{tpu_custom_call.1} parent=11 // pred_check
          %p401 = pneg %p109
        $region18: #{tpu_custom_call.1} parent=11 // pred_check_branch
          %403 = sbr.rel (%p401) target = $region20
        $region19: #{tpu_custom_call.1} parent=11 // pred_region
          %s405 = ssub.s32 16, 16
          %406 = vsyncadd [#allocation5], %s405
          %s408 = sshll.u32 [#allocation6], 4
          %s409 = int_to_ptr.vmem [resolvable:$true] %s408
          %411 = dma.hbm_to_vmem [thread:$0]  %s2, 16, %s409, [#allocation5]
        $region20: #{tpu_custom_call.1} parent=11 // pred_fallthru
          _
        // Predicated region
        $region21: #{tpu_custom_call.1} parent=11 // pred_check
          %p412 = pneg %p130
        $region22: #{tpu_custom_call.1} parent=11 // pred_check_branch
          %414 = sbr.rel (%p412) target = $region24
        $region23: #{tpu_custom_call.1} parent=11 // pred_region
          _
        $region24: #{tpu_custom_call.1} parent=11 // pred_fallthru
          _
        // Predicated region
        $region25: #{tpu_custom_call.1} parent=11 // pred_check
          %p415 = pneg %p151
        $region26: #{tpu_custom_call.1} parent=11 // pred_check_branch
          %417 = sbr.rel (%p415) target = $region28
        $region27: #{tpu_custom_call.1} parent=11 // pred_region
          %s419 = ssub.s32 16, 16
          %420 = vsyncadd [#allocation8], %s419
          %s422 = sshll.u32 [#allocation7], 4
          %s423 = int_to_ptr.vmem [resolvable:$true] %s422
          %425 = dma.hbm_to_vmem [thread:$0]  %s4, 16, %s423, [#allocation8]
        $region28: #{tpu_custom_call.1} parent=11 // pred_fallthru
          _
        // Predicated region
        $region29: #{tpu_custom_call.1} parent=11 // pred_check
          %p426 = pneg %p172
        $region30: #{tpu_custom_call.1} parent=11 // pred_check_branch
          %428 = sbr.rel (%p426) target = $region32
        $region31: #{tpu_custom_call.1} parent=11 // pred_region
          _
        $region32: #{tpu_custom_call.1} parent=11 // pred_fallthru
          _
        // Predicated region
        $region33: #{tpu_custom_call.1} parent=11 // pred_check
          %p429 = pneg %p193
        $region34: #{tpu_custom_call.1} parent=11 // pred_check_branch
          %431 = sbr.rel (%p429) target = $region36
        $region35: #{tpu_custom_call.1} parent=11 // pred_region
          %s433 = ssub.s32 16, 16
          %434 = vsyncadd [#allocation8], %s433
          %s436 = sshll.u32 [#allocation9], 4
          %s437 = int_to_ptr.vmem [resolvable:$true] %s436
          %439 = dma.hbm_to_vmem [thread:$0]  %s6, 16, %s437, [#allocation8]
        $region36: #{tpu_custom_call.1} parent=11 // pred_fallthru
          _
        // Predicated region
        $region37: #{tpu_custom_call.1} parent=11 // pred_check
          %p440 = pneg %p214
        $region38: #{tpu_custom_call.1} parent=11 // pred_check_branch
          %442 = sbr.rel (%p440) target = $region40
        $region39: #{tpu_custom_call.1} parent=11 // pred_region
          _
        $region40: #{tpu_custom_call.1} parent=11 // pred_fallthru
          _
        // Predicated region
        $region41: #{tpu_custom_call.1} parent=11 // pred_check
          %p443 = pneg %p235
        $region42: #{tpu_custom_call.1} parent=11 // pred_check_branch
          %445 = sbr.rel (%p443) target = $region44
        $region43: #{tpu_custom_call.1} parent=11 // pred_region
          %s447 = ssub.s32 16, 16
          %448 = vsyncadd [#allocation11], %s447
          %s450 = sshll.u32 [#allocation10], 4
          %s451 = int_to_ptr.vmem [resolvable:$true] %s450
          %453 = dma.hbm_to_vmem [thread:$0]  %s8, 16, %s451, [#allocation11]
        $region44: #{tpu_custom_call.1} parent=11 // pred_fallthru
          _
        // Predicated region
        $region45: #{tpu_custom_call.1} parent=11 // pred_check
          %p454 = pneg %p256
        $region46: #{tpu_custom_call.1} parent=11 // pred_check_branch
          %456 = sbr.rel (%p454) target = $region48
        $region47: #{tpu_custom_call.1} parent=11 // pred_region
          _
        $region48: #{tpu_custom_call.1} parent=11 // pred_fallthru
          _
        // Predicated region
        $region49: #{tpu_custom_call.1} parent=11 // pred_check
          %p457 = pneg %p277
        $region50: #{tpu_custom_call.1} parent=11 // pred_check_branch
          %459 = sbr.rel (%p457) target = $region52
        $region51: #{tpu_custom_call.1} parent=11 // pred_region
          %s461 = ssub.s32 16, 16
          %462 = vsyncadd [#allocation11], %s461
          %s464 = sshll.u32 [#allocation12], 4
          %s465 = int_to_ptr.vmem [resolvable:$true] %s464
          %467 = dma.hbm_to_vmem [thread:$0]  %s10, 16, %s465, [#allocation11]
        $region52: #{tpu_custom_call.1} parent=11 // pred_fallthru
          _
        // Predicated region
        $region53: #{tpu_custom_call.1} parent=11 // pred_check
          %p468 = pneg %p298
        $region54: #{tpu_custom_call.1} parent=11 // pred_check_branch
          %470 = sbr.rel (%p468) target = $region56
        $region55: #{tpu_custom_call.1} parent=11 // pred_region
          _
        $region56: #{tpu_custom_call.1} parent=11 // pred_fallthru
          _
        // Predicated region
        $region57: #{tpu_custom_call.1} parent=11 // pred_check
          %p471 = pneg %p319
        $region58: #{tpu_custom_call.1} parent=11 // pred_check_branch
          %473 = sbr.rel (%p471) target = $region60
        $region59: #{tpu_custom_call.1} parent=11 // pred_region
          _
        $region60: #{tpu_custom_call.1} parent=11 // pred_fallthru
          _
      $region12: #{tpu_custom_call.1} parent=5 // pred_fallthru
        _
      %p474 = scmp.lt.s32.totalorder %s27, 2
      // Predicated region
      $region61: #{tpu_custom_call.1} parent=5 // pred_check
        %p475 = pneg %p474
      $region62: #{tpu_custom_call.1} parent=5 // pred_check_branch
        %477 = sbr.rel (%p475) target = $region64
      $region63: #{tpu_custom_call.1} parent=5 // pred_region
        // Predicated region
        $region65: #{tpu_custom_call.1} parent=63 // pred_check
          %p478 = pneg %p61
        $region66: #{tpu_custom_call.1} parent=63 // pred_check_branch
          %480 = sbr.rel (%p478) target = $region68
        $region67: #{tpu_custom_call.1} parent=63 // pred_region
          %s481 = sand.u32 %s51, 1
          %s482 = scalar_lea.sflag [#allocation3], %s481
          %s483 = sand.u32 %s51, 1
          %s484 = smul.addr %s483, 8
          %s485 = scalar_lea.vmem [#allocation2], %s484
          %s487 = ssub.s32 128, 128
          %488 = vsyncadd %s482, %s487
          %s489 = sadd.s32 %s35, %s34
          %s490 = smul.addr %s489, 128
          %s491 = scalar_lea.hbm %s0, %s490
          %s493 = sshll.u32 %s485, 4
          %s494 = int_to_ptr.vmem [resolvable:$true] %s493
          %496 = dma.hbm_to_vmem [thread:$0]  %s491, 128, %s494, %s482
        $region68: #{tpu_custom_call.1} parent=63 // pred_fallthru
          _
      $region64: #{tpu_custom_call.1} parent=5 // pred_fallthru
        _
      %p497 = scmp.le.s32.totalorder 1, %s27
      %p498 = scmp.lt.s32.totalorder %s27, 3
      %p499 = pnand %p497, %p498
      %p500 = pneg %p499
      // Predicated region
      $region69: #{tpu_custom_call.1} parent=5 // pred_check
        _
      $region70: #{tpu_custom_call.1} parent=5 // pred_check_branch
        %502 = sbr.rel (%p499) target = $region72
      $region71: #{tpu_custom_call.1} parent=5 // pred_region
        %s503 = ssub.s32 %s27, 1
        %s504 = sand.u32 %s54, 1
        %s505 = scalar_lea.sflag [#allocation3], %s504
        %s506 = sand.u32 %s54, 1
        %s507 = smul.addr %s506, 8
        %s508 = scalar_lea.vmem [#allocation2], %s507
        // Predicated region
        $region73: #{tpu_custom_call.1} parent=71 // pred_check
          %p509 = pneg %p67
        $region74: #{tpu_custom_call.1} parent=71 // pred_check_branch
          %511 = sbr.rel (%p509) target = $region76
        $region75: #{tpu_custom_call.1} parent=71 // pred_region
          %512 = dma.done %s505, 128
        $region76: #{tpu_custom_call.1} parent=71 // pred_fallthru
          _
        // Predicated region
        $region77: #{tpu_custom_call.1} parent=71 // pred_check
          %p513 = pneg %p88
        $region78: #{tpu_custom_call.1} parent=71 // pred_check_branch
          %515 = sbr.rel (%p513) target = $region80
        $region79: #{tpu_custom_call.1} parent=71 // pred_region
          %516 = dma.done [#allocation5], 16
        $region80: #{tpu_custom_call.1} parent=71 // pred_fallthru
          _
        // Predicated region
        $region81: #{tpu_custom_call.1} parent=71 // pred_check
          %p517 = pneg %p109
        $region82: #{tpu_custom_call.1} parent=71 // pred_check_branch
          %519 = sbr.rel (%p517) target = $region84
        $region83: #{tpu_custom_call.1} parent=71 // pred_region
          %520 = dma.done [#allocation5], 16
        $region84: #{tpu_custom_call.1} parent=71 // pred_fallthru
          _
        // Predicated region
        $region85: #{tpu_custom_call.1} parent=71 // pred_check
          %p521 = pneg %p151
        $region86: #{tpu_custom_call.1} parent=71 // pred_check_branch
          %523 = sbr.rel (%p521) target = $region88
        $region87: #{tpu_custom_call.1} parent=71 // pred_region
          %524 = dma.done [#allocation8], 16
        $region88: #{tpu_custom_call.1} parent=71 // pred_fallthru
          _
        // Predicated region
        $region89: #{tpu_custom_call.1} parent=71 // pred_check
          %p525 = pneg %p193
        $region90: #{tpu_custom_call.1} parent=71 // pred_check_branch
          %527 = sbr.rel (%p525) target = $region92
        $region91: #{tpu_custom_call.1} parent=71 // pred_region
          %528 = dma.done [#allocation8], 16
        $region92: #{tpu_custom_call.1} parent=71 // pred_fallthru
          _
        // Predicated region
        $region93: #{tpu_custom_call.1} parent=71 // pred_check
          %p529 = pneg %p235
        $region94: #{tpu_custom_call.1} parent=71 // pred_check_branch
          %531 = sbr.rel (%p529) target = $region96
        $region95: #{tpu_custom_call.1} parent=71 // pred_region
          %532 = dma.done [#allocation11], 16
        $region96: #{tpu_custom_call.1} parent=71 // pred_fallthru
          _
        // Predicated region
        $region97: #{tpu_custom_call.1} parent=71 // pred_check
          %p533 = pneg %p277
        $region98: #{tpu_custom_call.1} parent=71 // pred_check_branch
          %535 = sbr.rel (%p533) target = $region100
        $region99: #{tpu_custom_call.1} parent=71 // pred_region
          %536 = dma.done [#allocation11], 16
        $region100: #{tpu_custom_call.1} parent=71 // pred_fallthru
          _
        %s537 = sand.u32 %s54, 1
        %s538 = scalar_lea.sflag [#allocation3], %s537
        %s539 = sand.u32 %s54, 1
        %s540 = smul.addr %s539, 8
        %s541 = scalar_lea.vmem [#allocation2], %s540
        %p542 = pneg %p67
        %p543 = pneg %p64
        %p544 = pneg %p88
        %p545 = pneg %p85
        %p546 = pneg %p109
        %p547 = pneg %p106
        %p548 = pneg %p130
        %p549 = pneg %p127
        %p550 = pneg %p151
        %p551 = pneg %p148
        %p552 = pneg %p172
        %p553 = pneg %p169
        %p554 = pneg %p193
        %p555 = pneg %p190
        %p556 = pneg %p214
        %p557 = pneg %p211
        %p558 = pneg %p235
        %p559 = pneg %p232
        %p560 = pneg %p256
        %p561 = pneg %p253
        %p562 = pneg %p277
        %p563 = pneg %p274
        %p564 = pneg %p298
        %p565 = pneg %p295
        %p566 = pneg %p319
        %p567 = pneg %p316
        %p568 = pneg %p347
        %p569 = pneg %p344
        %s570 = smul.u32 8, %s37
        %p571 = scmp.lt.s32.totalorder %s36, 1
        %s572 = scalar_select %p571, %s36, 1
        %p573 = scmp.lt.s32.totalorder %s570, 7
        %s574 = scalar_select %p573, %s570, 7
        %s575 = smul.addr %s572, 8
        %s576 = sadd.s32 %s574, %s575
        %s577 = smul.addr %s576, 4
        %s578 = scalar_lea.vmem %s13, %s577
        %p579 = pneg %p375
        %p580 = pneg %p372
        %s581 = smul.u32 8, %s37
        %p582 = scmp.lt.s32.totalorder %s36, 1
        %s583 = scalar_select %p582, %s36, 1
        %p584 = scmp.lt.s32.totalorder %s581, 7
        %s585 = scalar_select %p584, %s581, 7
        %s586 = smul.addr %s583, 8
        %s587 = sadd.s32 %s585, %s586
        %s588 = smul.addr %s587, 4
        %s589 = scalar_lea.vmem %s14, %s588
        %s590 = smul.u32 8, %s37
        %p591 = scmp.lt.s32.totalorder %s36, 1
        %s592 = scalar_select %p591, %s36, 1
        %p593 = scmp.lt.s32.totalorder %s590, 7
        %s594 = scalar_select %p593, %s590, 7
        %s595 = smul.addr %s592, 8
        %s596 = sadd.s32 %s594, %s595
        %s597 = smul.addr %s596, 4
        %s598 = scalar_lea.vmem %s13, %s597
        %s599 = smul.u32 8, %s37
        %s600 = smul.u32 8, %s37
        %p601 = scmp.lt.s32.totalorder %s36, 1
        %s602 = scalar_select %p601, %s36, 1
        %p603 = scmp.lt.s32.totalorder %s600, 7
        %s604 = scalar_select %p603, %s600, 7
        %s605 = smul.addr %s602, 8
        %s606 = sadd.s32 %s604, %s605
        %s607 = smul.addr %s606, 4
        %s608 = scalar_lea.vmem %s14, %s607
        %s609 = smul.u32 8, %s37
        %v611 = vld [vmem:[%s508] sm:$0xff]
        %612 = vxpose.xlu0.b32.start [1/16] %v611, 128
        %613 = vxpose.xlu0.b32.cont [2/16] 0.0, 128
        %614 = vxpose.xlu0.b32.cont [3/16] 0.0, 128
        %615 = vxpose.xlu0.b32.cont [4/16] 0.0, 128
        %616 = vxpose.xlu0.b32.cont [5/16] 0.0, 128
        %617 = vxpose.xlu0.b32.cont [6/16] 0.0, 128
        %618 = vxpose.xlu0.b32.cont [7/16] 0.0, 128
        %619 = vxpose.xlu0.b32.cont [8/16] 0.0, 128
        %620 = vxpose.xlu0.b32.cont [9/16] 0.0, 128
        %621 = vxpose.xlu0.b32.cont [10/16] 0.0, 128
        %622 = vxpose.xlu0.b32.cont [11/16] 0.0, 128
        %623 = vxpose.xlu0.b32.cont [12/16] 0.0, 128
        %624 = vxpose.xlu0.b32.cont [13/16] 0.0, 128
        %625 = vxpose.xlu0.b32.cont [14/16] 0.0, 128
        %626 = vxpose.xlu0.b32.cont [15/16] 0.0, 128
        %627 = vxpose.xlu0.b32.end [16/16] 0.0, 128
        %v628 = vpop.trf.xlu0
        %v629 = vpop.trf.xlu0
        %v630 = vpop.trf.xlu0
        %v631 = vpop.trf.xlu0
        %v632 = vpop.trf.xlu0
        %v633 = vpop.trf.xlu0
        %v634 = vpop.trf.xlu0
        %v635 = vpop.trf.xlu0
        %v636 = vpop.trf.xlu0
        %v637 = vpop.trf.xlu0
        %v638 = vpop.trf.xlu0
        %v639 = vpop.trf.xlu0
        %v640 = vpop.trf.xlu0
        %v641 = vpop.trf.xlu0
        %v642 = vpop.trf.xlu0
        %v643 = vpop.trf.xlu0
        %v644 = vld [vmem:[#allocation4] sm:$0x1]
        %v645 = vld [vmem:[#allocation6] sm:$0x1]
        %v646 = vld [vmem:[%s3] sm:$0xf]
        %v647 = vld [vmem:[#allocation7] sm:$0x1]
        %v648 = vld [vmem:[%s5] sm:$0xf]
        %v649 = vld [vmem:[#allocation9] sm:$0x1]
        %vm650 = vcmask 64512
        %v651 = vsel %vm650, %v628, 0.0
        %652 = vadd.xlane.f32.xlu0 %v651
        %v653 = vpop.xlane.xlu0 %652
        %v654 = vsel %vm650, %v629, 0.0
        %655 = vadd.xlane.f32.xlu0 %v654
        %v656 = vpop.xlane.xlu0 %655
        %v657 = vsel %vm650, %v630, 0.0
        %658 = vadd.xlane.f32.xlu0 %v657
        %v659 = vpop.xlane.xlu0 %658
        %v660 = vsel %vm650, %v631, 0.0
        %661 = vadd.xlane.f32.xlu0 %v660
        %v662 = vpop.xlane.xlu0 %661
        %v663 = vsel %vm650, %v632, 0.0
        %664 = vadd.xlane.f32.xlu0 %v663
        %v665 = vpop.xlane.xlu0 %664
        %v666 = vsel %vm650, %v633, 0.0
        %667 = vadd.xlane.f32.xlu0 %v666
        %v668 = vpop.xlane.xlu0 %667
        %v669 = vsel %vm650, %v634, 0.0
        %670 = vadd.xlane.f32.xlu0 %v669
        %v671 = vpop.xlane.xlu0 %670
        %v672 = vsel %vm650, %v635, 0.0
        %673 = vadd.xlane.f32.xlu0 %v672
        %v674 = vpop.xlane.xlu0 %673
        %v675 = vrcp.pop 8.0
        %v676 = vmul.f32 %v653, %v675
        %v677 = vmul.f32 %v656, %v675
        %v678 = vmul.f32 %v659, %v675
        %v679 = vmul.f32 %v662, %v675
        %v680 = vmul.f32 %v665, %v675
        %v681 = vmul.f32 %v668, %v675
        %v682 = vmul.f32 %v671, %v675
        %v683 = vmul.f32 %v674, %v675
        %v684 = vsub.f32 %v628, %v676
        %v685 = vsub.f32 %v629, %v677
        %v686 = vsub.f32 %v630, %v678
        %v687 = vsub.f32 %v631, %v679
        %v688 = vsub.f32 %v632, %v680
        %v689 = vsub.f32 %v633, %v681
        %v690 = vsub.f32 %v634, %v682
        %v691 = vsub.f32 %v635, %v683
        %v692 = vmul.f32 %v684, %v684
        %v693 = vmul.f32 %v685, %v685
        %v694 = vmul.f32 %v686, %v686
        %v695 = vmul.f32 %v687, %v687
        %v696 = vmul.f32 %v688, %v688
        %v697 = vmul.f32 %v689, %v689
        %v698 = vmul.f32 %v690, %v690
        %v699 = vmul.f32 %v691, %v691
        %v700 = vsel %vm650, %v692, 0.0
        %701 = vadd.xlane.f32.xlu0 %v700
        %v702 = vpop.xlane.xlu0 %701
        %v703 = vsel %vm650, %v693, 0.0
        %704 = vadd.xlane.f32.xlu0 %v703
        %v705 = vpop.xlane.xlu0 %704
        %v706 = vsel %vm650, %v694, 0.0
        %707 = vadd.xlane.f32.xlu0 %v706
        %v708 = vpop.xlane.xlu0 %707
        %v709 = vsel %vm650, %v695, 0.0
        %710 = vadd.xlane.f32.xlu0 %v709
        %v711 = vpop.xlane.xlu0 %710
        %v712 = vsel %vm650, %v696, 0.0
        %713 = vadd.xlane.f32.xlu0 %v712
        %v714 = vpop.xlane.xlu0 %713
        %v715 = vsel %vm650, %v697, 0.0
        %716 = vadd.xlane.f32.xlu0 %v715
        %v717 = vpop.xlane.xlu0 %716
        %v718 = vsel %vm650, %v698, 0.0
        %719 = vadd.xlane.f32.xlu0 %v718
        %v720 = vpop.xlane.xlu0 %719
        %v721 = vsel %vm650, %v699, 0.0
        %722 = vadd.xlane.f32.xlu0 %v721
        %v723 = vpop.xlane.xlu0 %722
        %v724 = vmul.f32 %v702, %v675
        %v725 = vmul.f32 %v705, %v675
        %v726 = vmul.f32 %v708, %v675
        %v727 = vmul.f32 %v711, %v675
        %v728 = vmul.f32 %v714, %v675
        %v729 = vmul.f32 %v717, %v675
        %v730 = vmul.f32 %v720, %v675
        %v731 = vmul.f32 %v723, %v675
        %v732 = vadd.f32 %v724, 1e-05
        %v733 = vadd.f32 %v725, 1e-05
        %v734 = vadd.f32 %v726, 1e-05
        %v735 = vadd.f32 %v727, 1e-05
        %v736 = vadd.f32 %v728, 1e-05
        %v737 = vadd.f32 %v729, 1e-05
        %v738 = vadd.f32 %v730, 1e-05
        %v739 = vadd.f32 %v731, 1e-05
        %v740 = vrsqrt.pop %v732
        %v741 = vrsqrt.pop %v733
        %v742 = vrsqrt.pop %v734
        %v743 = vrsqrt.pop %v735
        %v744 = vrsqrt.pop %v736
        %v745 = vrsqrt.pop %v737
        %v746 = vrsqrt.pop %v738
        %v747 = vrsqrt.pop %v739
        %v748 = vmul.f32 %v684, %v740
        %v749 = vmul.f32 %v685, %v741
        %v750 = vmul.f32 %v686, %v742
        %v751 = vmul.f32 %v687, %v743
        %v752 = vmul.f32 %v688, %v744
        %v753 = vmul.f32 %v689, %v745
        %v754 = vmul.f32 %v690, %v746
        %v755 = vmul.f32 %v691, %v747
        %v757 = vlaneseq
        %v758 = vshrl.u32 %v757, 7
        %v759 = vsub.s32 0, %v758
        %v760 = vrot.slane %v644, %v759
        %v762 = vmul.f32 %v748, %v760
        %v763 = vmul.f32 %v749, %v760
        %v764 = vmul.f32 %v750, %v760
        %v765 = vmul.f32 %v751, %v760
        %v766 = vmul.f32 %v752, %v760
        %v767 = vmul.f32 %v753, %v760
        %v768 = vmul.f32 %v754, %v760
        %v769 = vmul.f32 %v755, %v760
        %v771 = vlaneseq
        %v772 = vshrl.u32 %v771, 7
        %v773 = vsub.s32 0, %v772
        %v774 = vrot.slane %v645, %v773
        %v776 = vadd.f32 %v762, %v774
        %v777 = vadd.f32 %v763, %v774
        %v778 = vadd.f32 %v764, %v774
        %v779 = vadd.f32 %v765, %v774
        %v780 = vadd.f32 %v766, %v774
        %v781 = vadd.f32 %v767, %v774
        %v782 = vadd.f32 %v768, %v774
        %v783 = vadd.f32 %v769, %v774
        %v784 = vpack.c.bf16 %v777, %v776
        %v785 = vpack.c.bf16 %v779, %v778
        %v786 = vpack.c.bf16 %v781, %v780
        %v787 = vpack.c.bf16 %v783, %v782
        %v789 = vlaneseq
        %v790 = vshrl.u32 %v789, 7
        %v791 = vsub.s32 0, %v790
        %v792 = vrot.slane %v647, %v791
        %v795 = vsel %vm650, %v784, 0
        %v798 = vsel %vm650, %v785, 0
        %v801 = vsel %vm650, %v786, 0
        %v804 = vsel %vm650, %v787, 0
        %vm806 = vcmask 1043456
        %v808 = vsel %vm806, %v646, 0
        %810 = vmatprep.subr.bf16.mxu0 0
        %811 = vmatpush1.bf16.msra.mxu0 0
        %812 = vmatprep.subr.bf16.mxu0 0
        %813 = vmatpush1.bf16.msra.mxu0 0
        %814 = vmatprep.subr.bf16.mxu0 0
        %815 = vmatpush1.bf16.msra.mxu0 0
        %816 = vmatprep.subr.bf16.mxu0 0
        %817 = vmatpush1.bf16.msra.mxu0 0
        %818 = vmatprep.subr.bf16.mxu0 0
        %819 = vmatpush1.bf16.msra.mxu0 0
        %820 = vmatprep.subr.bf16.mxu0 0
        %821 = vmatpush1.bf16.msra.mxu0 0
        %822 = vmatprep.subr.bf16.mxu0 0
        %823 = vmatpush1.bf16.msra.mxu0 0
        %824 = vmatprep.subr.bf16.mxu0 0
        %825 = vmatpush1.bf16.msra.mxu0 %v808
        %826 = vmatprep.subr.bf16.mxu0 0
        %827 = vmatpush2.bf16.msra.mxu0 0
        %828 = vmatprep.subr.bf16.mxu0 0
        %829 = vmatpush2.bf16.msra.mxu0 0
        %830 = vmatprep.subr.bf16.mxu0 0
        %831 = vmatpush2.bf16.msra.mxu0 0
        %832 = vmatprep.subr.bf16.mxu0 0
        %833 = vmatpush2.bf16.msra.mxu0 0
        %834 = vmatprep.subr.bf16.mxu0 0
        %835 = vmatpush2.bf16.msra.mxu0 0
        %836 = vmatprep.subr.bf16.mxu0 0
        %837 = vmatpush2.bf16.msra.mxu0 0
        %838 = vmatprep.subr.bf16.mxu0 0
        %839 = vmatpush2.bf16.msra.mxu0 0
        %840 = vmatprep.subr.bf16.mxu0 0
        %841 = vmatpush2.bf16.msra.mxu0 0
        %842 = vmatprep.mubr.bf16.mxu0 0
        %843 = vmatmul.mubr.bf16.gmra.mxu0 %v795
        %v844 = vpop.f32.mrf.mxu0
        %v845 = vadd.f32 %v792, %v844
        %v846 = vpop.f32.mrf.mxu0
        %v847 = vpop.f32.mrf.mxu0
        %v848 = vadd.f32 %v792, %v847
        %v849 = vpop.f32.mrf.mxu0
        %850 = vmatprep.mubr.bf16.mxu0 0
        %851 = vmatmul.mubr.bf16.gmra.mxu0 %v798
        %v852 = vpop.f32.mrf.mxu0
        %v853 = vadd.f32 %v792, %v852
        %v854 = vpop.f32.mrf.mxu0
        %v855 = vpop.f32.mrf.mxu0
        %v856 = vadd.f32 %v792, %v855
        %v857 = vpop.f32.mrf.mxu0
        %858 = vmatprep.mubr.bf16.mxu0 0
        %859 = vmatmul.mubr.bf16.gmra.mxu0 %v801
        %v860 = vpop.f32.mrf.mxu0
        %v861 = vadd.f32 %v792, %v860
        %v862 = vpop.f32.mrf.mxu0
        %v863 = vpop.f32.mrf.mxu0
        %v864 = vadd.f32 %v792, %v863
        %v865 = vpop.f32.mrf.mxu0
        %866 = vmatprep.mubr.bf16.mxu0 0
        %867 = vmatmul.mubr.bf16.gmra.mxu0 %v804
        %v868 = vpop.f32.mrf.mxu0
        %v869 = vadd.f32 %v792, %v868
        %v870 = vpop.f32.mrf.mxu0
        %v871 = vpop.f32.mrf.mxu0
        %v872 = vadd.f32 %v792, %v871
        %v873 = vpop.f32.mrf.mxu0
        %874 = vdwg.mxu0
        %v875 = vmul.f32 %v845, 0.5
        %v876 = vmul.f32 %v848, 0.5
        %v877 = vmul.f32 %v853, 0.5
        %v878 = vmul.f32 %v856, 0.5
        %v879 = vmul.f32 %v861, 0.5
        %v880 = vmul.f32 %v864, 0.5
        %v881 = vmul.f32 %v869, 0.5
        %v882 = vmul.f32 %v872, 0.5
        %v883 = vmul.f32 %v845, 0.70710677
        %v884 = vmul.f32 %v848, 0.70710677
        %v885 = vmul.f32 %v853, 0.70710677
        %v886 = vmul.f32 %v856, 0.70710677
        %v887 = vmul.f32 %v861, 0.70710677
        %v888 = vmul.f32 %v864, 0.70710677
        %v889 = vmul.f32 %v869, 0.70710677
        %v890 = vmul.f32 %v872, 0.70710677
        %v891 = vand.u32 2147483647, %v883
        %v892 = vand.u32 2147483647, %v884
        %v893 = vand.u32 2147483647, %v885
        %v894 = vand.u32 2147483647, %v886
        %v895 = vand.u32 2147483647, %v887
        %v896 = vand.u32 2147483647, %v888
        %v897 = vand.u32 2147483647, %v889
        %v898 = vand.u32 2147483647, %v890
        %v899 = vmul.f32 %v891, 0.3275911
        %v900 = vmul.f32 %v892, 0.3275911
        %v901 = vmul.f32 %v893, 0.3275911
        %v902 = vmul.f32 %v894, 0.3275911
        %v903 = vmul.f32 %v895, 0.3275911
        %v904 = vmul.f32 %v896, 0.3275911
        %v905 = vmul.f32 %v897, 0.3275911
        %v906 = vmul.f32 %v898, 0.3275911
        %v907 = vadd.f32 %v899, 1.0
        %v908 = vadd.f32 %v900, 1.0
        %v909 = vadd.f32 %v901, 1.0
        %v910 = vadd.f32 %v902, 1.0
        %v911 = vadd.f32 %v903, 1.0
        %v912 = vadd.f32 %v904, 1.0
        %v913 = vadd.f32 %v905, 1.0
        %v914 = vadd.f32 %v906, 1.0
        %v915 = vrcp.pop %v907
        %v916 = vrcp.pop %v908
        %v917 = vrcp.pop %v909
        %v918 = vrcp.pop %v910
        %v919 = vrcp.pop %v911
        %v920 = vrcp.pop %v912
        %v921 = vrcp.pop %v913
        %v922 = vrcp.pop %v914
        %v923 = vmul.f32 %v915, 1.0614054
        %v924 = vmul.f32 %v916, 1.0614054
        %v925 = vmul.f32 %v917, 1.0614054
        %v926 = vmul.f32 %v918, 1.0614054
        %v927 = vmul.f32 %v919, 1.0614054
        %v928 = vmul.f32 %v920, 1.0614054
        %v929 = vmul.f32 %v921, 1.0614054
        %v930 = vmul.f32 %v922, 1.0614054
        %v931 = vadd.f32 %v923, -1.4531521
        %v932 = vadd.f32 %v924, -1.4531521
        %v933 = vadd.f32 %v925, -1.4531521
        %v934 = vadd.f32 %v926, -1.4531521
        %v935 = vadd.f32 %v927, -1.4531521
        %v936 = vadd.f32 %v928, -1.4531521
        %v937 = vadd.f32 %v929, -1.4531521
        %v938 = vadd.f32 %v930, -1.4531521
        %v939 = vmul.f32 %v931, %v915
        %v940 = vmul.f32 %v932, %v916
        %v941 = vmul.f32 %v933, %v917
        %v942 = vmul.f32 %v934, %v918
        %v943 = vmul.f32 %v935, %v919
        %v944 = vmul.f32 %v936, %v920
        %v945 = vmul.f32 %v937, %v921
        %v946 = vmul.f32 %v938, %v922
        %v947 = vadd.f32 %v939, 1.4214138
        %v948 = vadd.f32 %v940, 1.4214138
        %v949 = vadd.f32 %v941, 1.4214138
        %v950 = vadd.f32 %v942, 1.4214138
        %v951 = vadd.f32 %v943, 1.4214138
        %v952 = vadd.f32 %v944, 1.4214138
        %v953 = vadd.f32 %v945, 1.4214138
        %v954 = vadd.f32 %v946, 1.4214138
        %v955 = vmul.f32 %v947, %v915
        %v956 = vmul.f32 %v948, %v916
        %v957 = vmul.f32 %v949, %v917
        %v958 = vmul.f32 %v950, %v918
        %v959 = vmul.f32 %v951, %v919
        %v960 = vmul.f32 %v952, %v920
        %v961 = vmul.f32 %v953, %v921
        %v962 = vmul.f32 %v954, %v922
        %v963 = vadd.f32 %v955, -0.28449672
        %v964 = vadd.f32 %v956, -0.28449672
        %v965 = vadd.f32 %v957, -0.28449672
        %v966 = vadd.f32 %v958, -0.28449672
        %v967 = vadd.f32 %v959, -0.28449672
        %v968 = vadd.f32 %v960, -0.28449672
        %v969 = vadd.f32 %v961, -0.28449672
        %v970 = vadd.f32 %v962, -0.28449672
        %v971 = vmul.f32 %v963, %v915
        %v972 = vmul.f32 %v964, %v916
        %v973 = vmul.f32 %v965, %v917
        %v974 = vmul.f32 %v966, %v918
        %v975 = vmul.f32 %v967, %v919
        %v976 = vmul.f32 %v968, %v920
        %v977 = vmul.f32 %v969, %v921
        %v978 = vmul.f32 %v970, %v922
        %v979 = vadd.f32 %v971, 0.2548296
        %v980 = vadd.f32 %v972, 0.2548296
        %v981 = vadd.f32 %v973, 0.2548296
        %v982 = vadd.f32 %v974, 0.2548296
        %v983 = vadd.f32 %v975, 0.2548296
        %v984 = vadd.f32 %v976, 0.2548296
        %v985 = vadd.f32 %v977, 0.2548296
        %v986 = vadd.f32 %v978, 0.2548296
        %v987 = vmul.f32 %v979, %v915
        %v988 = vmul.f32 %v980, %v916
        %v989 = vmul.f32 %v981, %v917
        %v990 = vmul.f32 %v982, %v918
        %v991 = vmul.f32 %v983, %v919
        %v992 = vmul.f32 %v984, %v920
        %v993 = vmul.f32 %v985, %v921
        %v994 = vmul.f32 %v986, %v922
        %v995 = vsub.f32 0.0, %v891
        %v996 = vsub.f32 0.0, %v892
        %v997 = vsub.f32 0.0, %v893
        %v998 = vsub.f32 0.0, %v894
        %v999 = vsub.f32 0.0, %v895
        %v1000 = vsub.f32 0.0, %v896
        %v1001 = vsub.f32 0.0, %v897
        %v1002 = vsub.f32 0.0, %v898
        %v1003 = vmul.f32 %v995, %v891
        %v1004 = vmul.f32 %v996, %v892
        %v1005 = vmul.f32 %v997, %v893
        %v1006 = vmul.f32 %v998, %v894
        %v1007 = vmul.f32 %v999, %v895
        %v1008 = vmul.f32 %v1000, %v896
        %v1009 = vmul.f32 %v1001, %v897
        %v1010 = vmul.f32 %v1002, %v898
        %v1011 = vmul.f32 %v1003, 1.442695
        %v1012 = vpow.pop %v1011
        %v1013 = vmul.f32 %v1004, 1.442695
        %v1014 = vpow.pop %v1013
        %v1015 = vmul.f32 %v1005, 1.442695
        %v1016 = vpow.pop %v1015
        %v1017 = vmul.f32 %v1006, 1.442695
        %v1018 = vpow.pop %v1017
        %v1019 = vmul.f32 %v1007, 1.442695
        %v1020 = vpow.pop %v1019
        %v1021 = vmul.f32 %v1008, 1.442695
        %v1022 = vpow.pop %v1021
        %v1023 = vmul.f32 %v1009, 1.442695
        %v1024 = vpow.pop %v1023
        %v1025 = vmul.f32 %v1010, 1.442695
        %v1026 = vpow.pop %v1025
        %v1027 = vmul.f32 %v987, %v1012
        %v1028 = vmul.f32 %v988, %v1014
        %v1029 = vmul.f32 %v989, %v1016
        %v1030 = vmul.f32 %v990, %v1018
        %v1031 = vmul.f32 %v991, %v1020
        %v1032 = vmul.f32 %v992, %v1022
        %v1033 = vmul.f32 %v993, %v1024
        %v1034 = vmul.f32 %v994, %v1026
        %v1035 = vsub.f32 1.0, %v1027
        %v1036 = vsub.f32 1.0, %v1028
        %v1037 = vsub.f32 1.0, %v1029
        %v1038 = vsub.f32 1.0, %v1030
        %v1039 = vsub.f32 1.0, %v1031
        %v1040 = vsub.f32 1.0, %v1032
        %v1041 = vsub.f32 1.0, %v1033
        %v1042 = vsub.f32 1.0, %v1034
        %vm1043 = vcmp.ge.f32.partialorder %v883, 0.0
        %vm1044 = vcmp.ge.f32.partialorder %v884, 0.0
        %vm1045 = vcmp.ge.f32.partialorder %v885, 0.0
        %vm1046 = vcmp.ge.f32.partialorder %v886, 0.0
        %vm1047 = vcmp.ge.f32.partialorder %v887, 0.0
        %vm1048 = vcmp.ge.f32.partialorder %v888, 0.0
        %vm1049 = vcmp.ge.f32.partialorder %v889, 0.0
        %vm1050 = vcmp.ge.f32.partialorder %v890, 0.0
        %v1051 = vsub.f32 0.0, %v1035
        %v1052 = vsub.f32 0.0, %v1036
        %v1053 = vsub.f32 0.0, %v1037
        %v1054 = vsub.f32 0.0, %v1038
        %v1055 = vsub.f32 0.0, %v1039
        %v1056 = vsub.f32 0.0, %v1040
        %v1057 = vsub.f32 0.0, %v1041
        %v1058 = vsub.f32 0.0, %v1042
        %v1059 = vsel %vm1043, %v1035, %v1051
        %v1060 = vsel %vm1044, %v1036, %v1052
        %v1061 = vsel %vm1045, %v1037, %v1053
        %v1062 = vsel %vm1046, %v1038, %v1054
        %v1063 = vsel %vm1047, %v1039, %v1055
        %v1064 = vsel %vm1048, %v1040, %v1056
        %v1065 = vsel %vm1049, %v1041, %v1057
        %v1066 = vsel %vm1050, %v1042, %v1058
        %v1067 = vadd.f32 %v1059, 1.0
        %v1068 = vadd.f32 %v1060, 1.0
        %v1069 = vadd.f32 %v1061, 1.0
        %v1070 = vadd.f32 %v1062, 1.0
        %v1071 = vadd.f32 %v1063, 1.0
        %v1072 = vadd.f32 %v1064, 1.0
        %v1073 = vadd.f32 %v1065, 1.0
        %v1074 = vadd.f32 %v1066, 1.0
        %v1075 = vmul.f32 %v875, %v1067
        %v1076 = vmul.f32 %v876, %v1068
        %v1077 = vmul.f32 %v877, %v1069
        %v1078 = vmul.f32 %v878, %v1070
        %v1079 = vmul.f32 %v879, %v1071
        %v1080 = vmul.f32 %v880, %v1072
        %v1081 = vmul.f32 %v881, %v1073
        %v1082 = vmul.f32 %v882, %v1074
        %v1083 = vpack.c.bf16 %v1076, %v1075
        %v1084 = vpack.c.bf16 %v1078, %v1077
        %v1085 = vpack.c.bf16 %v1080, %v1079
        %v1086 = vpack.c.bf16 %v1082, %v1081
        %v1088 = vlaneseq
        %v1089 = vshrl.u32 %v1088, 7
        %v1090 = vsub.s32 0, %v1089
        %v1091 = vrot.slane %v649, %v1090
        %v1094 = vsel %vm650, %v1083, 0
        %v1097 = vsel %vm650, %v1084, 0
        %v1100 = vsel %vm650, %v1085, 0
        %v1103 = vsel %vm650, %v1086, 0
        %v1106 = vsel %vm806, %v648, 0
        %1108 = vmatprep.subr.bf16.mxu0 0
        %1109 = vmatpush1.bf16.msra.mxu0 0
        %1110 = vmatprep.subr.bf16.mxu0 0
        %1111 = vmatpush1.bf16.msra.mxu0 0
        %1112 = vmatprep.subr.bf16.mxu0 0
        %1113 = vmatpush1.bf16.msra.mxu0 0
        %1114 = vmatprep.subr.bf16.mxu0 0
        %1115 = vmatpush1.bf16.msra.mxu0 0
        %1116 = vmatprep.subr.bf16.mxu0 0
        %1117 = vmatpush1.bf16.msra.mxu0 0
        %1118 = vmatprep.subr.bf16.mxu0 0
        %1119 = vmatpush1.bf16.msra.mxu0 0
        %1120 = vmatprep.subr.bf16.mxu0 0
        %1121 = vmatpush1.bf16.msra.mxu0 0
        %1122 = vmatprep.subr.bf16.mxu0 0
        %1123 = vmatpush1.bf16.msra.mxu0 %v1106
        %1124 = vmatprep.subr.bf16.mxu0 0
        %1125 = vmatpush2.bf16.msra.mxu0 0
        %1126 = vmatprep.subr.bf16.mxu0 0
        %1127 = vmatpush2.bf16.msra.mxu0 0
        %1128 = vmatprep.subr.bf16.mxu0 0
        %1129 = vmatpush2.bf16.msra.mxu0 0
        %1130 = vmatprep.subr.bf16.mxu0 0
        %1131 = vmatpush2.bf16.msra.mxu0 0
        %1132 = vmatprep.subr.bf16.mxu0 0
        %1133 = vmatpush2.bf16.msra.mxu0 0
        %1134 = vmatprep.subr.bf16.mxu0 0
        %1135 = vmatpush2.bf16.msra.mxu0 0
        %1136 = vmatprep.subr.bf16.mxu0 0
        %1137 = vmatpush2.bf16.msra.mxu0 0
        %1138 = vmatprep.subr.bf16.mxu0 0
        %1139 = vmatpush2.bf16.msra.mxu0 0
        %1140 = vmatprep.mubr.bf16.mxu0 0
        %1141 = vmatmul.mubr.bf16.gmra.mxu0 %v1094
        %v1142 = vpop.f32.mrf.mxu0
        %v1143 = vadd.f32 %v1091, %v1142
        %v1144 = vpop.f32.mrf.mxu0
        %v1145 = vpop.f32.mrf.mxu0
        %v1146 = vadd.f32 %v1091, %v1145
        %v1147 = vpop.f32.mrf.mxu0
        %1148 = vmatprep.mubr.bf16.mxu0 0
        %1149 = vmatmul.mubr.bf16.gmra.mxu0 %v1097
        %v1150 = vpop.f32.mrf.mxu0
        %v1151 = vadd.f32 %v1091, %v1150
        %v1152 = vpop.f32.mrf.mxu0
        %v1153 = vpop.f32.mrf.mxu0
        %v1154 = vadd.f32 %v1091, %v1153
        %v1155 = vpop.f32.mrf.mxu0
        %1156 = vmatprep.mubr.bf16.mxu0 0
        %1157 = vmatmul.mubr.bf16.gmra.mxu0 %v1100
        %v1158 = vpop.f32.mrf.mxu0
        %v1159 = vadd.f32 %v1091, %v1158
        %v1160 = vpop.f32.mrf.mxu0
        %v1161 = vpop.f32.mrf.mxu0
        %v1162 = vadd.f32 %v1091, %v1161
        %v1163 = vpop.f32.mrf.mxu0
        %1164 = vmatprep.mubr.bf16.mxu0 0
        %1165 = vmatmul.mubr.bf16.gmra.mxu0 %v1103
        %v1166 = vpop.f32.mrf.mxu0
        %v1167 = vadd.f32 %v1091, %v1166
        %v1168 = vpop.f32.mrf.mxu0
        %v1169 = vpop.f32.mrf.mxu0
        %v1170 = vadd.f32 %v1091, %v1169
        %v1171 = vpop.f32.mrf.mxu0
        %1172 = vdwg.mxu0
        %v1173 = vpack.c.bf16 %v1146, %v1143
        %v1174 = vpack.c.bf16 %v1154, %v1151
        %v1175 = vpack.c.bf16 %v1162, %v1159
        %v1176 = vpack.c.bf16 %v1170, %v1167
        %v1177 = vld [vmem:[%s7] sm:$0xf]
        %v1178 = vld [vmem:[#allocation10] sm:$0x1]
        %v1180 = vlaneseq
        %v1181 = vshrl.u32 %v1180, 7
        %v1182 = vsub.s32 0, %v1181
        %v1183 = vrot.slane %v1178, %v1182
        %v1186 = vsel %vm650, %v1173, 0
        %v1189 = vsel %vm650, %v1174, 0
        %v1192 = vsel %vm650, %v1175, 0
        %v1195 = vsel %vm650, %v1176, 0
        %v1198 = vsel %vm806, %v1177, 0
        %1200 = vmatprep.subr.bf16.mxu0 0
        %1201 = vmatpush1.bf16.msra.mxu0 0
        %1202 = vmatprep.subr.bf16.mxu0 0
        %1203 = vmatpush1.bf16.msra.mxu0 0
        %1204 = vmatprep.subr.bf16.mxu0 0
        %1205 = vmatpush1.bf16.msra.mxu0 0
        %1206 = vmatprep.subr.bf16.mxu0 0
        %1207 = vmatpush1.bf16.msra.mxu0 0
        %1208 = vmatprep.subr.bf16.mxu0 0
        %1209 = vmatpush1.bf16.msra.mxu0 0
        %1210 = vmatprep.subr.bf16.mxu0 0
        %1211 = vmatpush1.bf16.msra.mxu0 0
        %1212 = vmatprep.subr.bf16.mxu0 0
        %1213 = vmatpush1.bf16.msra.mxu0 0
        %1214 = vmatprep.subr.bf16.mxu0 0
        %1215 = vmatpush1.bf16.msra.mxu0 %v1198
        %1216 = vmatprep.subr.bf16.mxu0 0
        %1217 = vmatpush2.bf16.msra.mxu0 0
        %1218 = vmatprep.subr.bf16.mxu0 0
        %1219 = vmatpush2.bf16.msra.mxu0 0
        %1220 = vmatprep.subr.bf16.mxu0 0
        %1221 = vmatpush2.bf16.msra.mxu0 0
        %1222 = vmatprep.subr.bf16.mxu0 0
        %1223 = vmatpush2.bf16.msra.mxu0 0
        %1224 = vmatprep.subr.bf16.mxu0 0
        %1225 = vmatpush2.bf16.msra.mxu0 0
        %1226 = vmatprep.subr.bf16.mxu0 0
        %1227 = vmatpush2.bf16.msra.mxu0 0
        %1228 = vmatprep.subr.bf16.mxu0 0
        %1229 = vmatpush2.bf16.msra.mxu0 0
        %1230 = vmatprep.subr.bf16.mxu0 0
        %1231 = vmatpush2.bf16.msra.mxu0 0
        %1232 = vmatprep.mubr.bf16.mxu0 0
        %1233 = vmatmul.mubr.bf16.gmra.mxu0 %v1186
        %v1234 = vpop.f32.mrf.mxu0
        %v1235 = vadd.f32 %v1183, %v1234
        %v1236 = vpop.f32.mrf.mxu0
        %v1237 = vpop.f32.mrf.mxu0
        %v1238 = vadd.f32 %v1183, %v1237
        %v1239 = vpop.f32.mrf.mxu0
        %1240 = vmatprep.mubr.bf16.mxu0 0
        %1241 = vmatmul.mubr.bf16.gmra.mxu0 %v1189
        %v1242 = vpop.f32.mrf.mxu0
        %v1243 = vadd.f32 %v1183, %v1242
        %v1244 = vpop.f32.mrf.mxu0
        %v1245 = vpop.f32.mrf.mxu0
        %v1246 = vadd.f32 %v1183, %v1245
        %v1247 = vpop.f32.mrf.mxu0
        %1248 = vmatprep.mubr.bf16.mxu0 0
        %1249 = vmatmul.mubr.bf16.gmra.mxu0 %v1192
        %v1250 = vpop.f32.mrf.mxu0
        %v1251 = vadd.f32 %v1183, %v1250
        %v1252 = vpop.f32.mrf.mxu0
        %v1253 = vpop.f32.mrf.mxu0
        %v1254 = vadd.f32 %v1183, %v1253
        %v1255 = vpop.f32.mrf.mxu0
        %1256 = vmatprep.mubr.bf16.mxu0 0
        %1257 = vmatmul.mubr.bf16.gmra.mxu0 %v1195
        %v1258 = vpop.f32.mrf.mxu0
        %v1259 = vadd.f32 %v1183, %v1258
        %v1260 = vpop.f32.mrf.mxu0
        %v1261 = vpop.f32.mrf.mxu0
        %v1262 = vadd.f32 %v1183, %v1261
        %v1263 = vpop.f32.mrf.mxu0
        %1264 = vdwg.mxu0
        %v1265 = vpack.c.bf16 %v1238, %v1235
        %v1266 = vpack.c.bf16 %v1246, %v1243
        %v1267 = vpack.c.bf16 %v1254, %v1251
        %v1268 = vpack.c.bf16 %v1262, %v1259
        %v1273 = vunpack.c.l.b16 %v1265
        %v1274 = vunpack.c.h.b16 %v1265
        %v1275 = vunpack.c.l.b16 %v1266
        %v1276 = vunpack.c.h.b16 %v1266
        %v1277 = vunpack.c.l.b16 %v1267
        %v1278 = vunpack.c.h.b16 %v1267
        %v1279 = vunpack.c.l.b16 %v1268
        %v1280 = vunpack.c.h.b16 %v1268
        %v1281 = vpack.c.b16 %v1273, %v1273
        %v1282 = vpack.c.b16 %v1274, %v1274
        %v1283 = vpack.c.b16 %v1275, %v1275
        %v1284 = vpack.c.b16 %v1276, %v1276
        %v1285 = vpack.c.b16 %v1277, %v1277
        %v1286 = vpack.c.b16 %v1278, %v1278
        %v1287 = vpack.c.b16 %v1279, %v1279
        %v1288 = vpack.c.b16 %v1280, %v1280
        %vm1297 = vcmask 60416
        %1298 = vst.msk [vmem:[%s598] sm:$0xf] %vm1297, %v1281
        %1299 = vst.msk [vmem:[%s598 + $0x4] sm:$0xf] %vm1297, %v1282
        %1300 = vst.msk [vmem:[%s598 + $0x8] sm:$0xf] %vm1297, %v1283
        %1301 = vst.msk [vmem:[%s598 + $0xc] sm:$0xf] %vm1297, %v1284
        %1302 = vst.msk [vmem:[%s598 + $0x10] sm:$0xf] %vm1297, %v1285
        %1303 = vst.msk [vmem:[%s598 + $0x14] sm:$0xf] %vm1297, %v1286
        %1304 = vst.msk [vmem:[%s598 + $0x18] sm:$0xf] %vm1297, %v1287
        %1305 = vst.msk [vmem:[%s598 + $0x1c] sm:$0xf] %vm1297, %v1288
        %v1306 = vld [vmem:[%s9] sm:$0xf]
        %v1307 = vld [vmem:[#allocation12] sm:$0x1]
        %v1309 = vlaneseq
        %v1310 = vshrl.u32 %v1309, 7
        %v1311 = vsub.s32 0, %v1310
        %v1312 = vrot.slane %v1307, %v1311
        %v1315 = vsel %vm806, %v1306, 0
        %1317 = vmatprep.subr.bf16.mxu0 0
        %1318 = vmatpush1.bf16.msra.mxu0 0
        %1319 = vmatprep.subr.bf16.mxu0 0
        %1320 = vmatpush1.bf16.msra.mxu0 0
        %1321 = vmatprep.subr.bf16.mxu0 0
        %1322 = vmatpush1.bf16.msra.mxu0 0
        %1323 = vmatprep.subr.bf16.mxu0 0
        %1324 = vmatpush1.bf16.msra.mxu0 0
        %1325 = vmatprep.subr.bf16.mxu0 0
        %1326 = vmatpush1.bf16.msra.mxu0 0
        %1327 = vmatprep.subr.bf16.mxu0 0
        %1328 = vmatpush1.bf16.msra.mxu0 0
        %1329 = vmatprep.subr.bf16.mxu0 0
        %1330 = vmatpush1.bf16.msra.mxu0 0
        %1331 = vmatprep.subr.bf16.mxu0 0
        %1332 = vmatpush1.bf16.msra.mxu0 %v1315
        %1333 = vmatprep.subr.bf16.mxu0 0
        %1334 = vmatpush2.bf16.msra.mxu0 0
        %1335 = vmatprep.subr.bf16.mxu0 0
        %1336 = vmatpush2.bf16.msra.mxu0 0
        %1337 = vmatprep.subr.bf16.mxu0 0
        %1338 = vmatpush2.bf16.msra.mxu0 0
        %1339 = vmatprep.subr.bf16.mxu0 0
        %1340 = vmatpush2.bf16.msra.mxu0 0
        %1341 = vmatprep.subr.bf16.mxu0 0
        %1342 = vmatpush2.bf16.msra.mxu0 0
        %1343 = vmatprep.subr.bf16.mxu0 0
        %1344 = vmatpush2.bf16.msra.mxu0 0
        %1345 = vmatprep.subr.bf16.mxu0 0
        %1346 = vmatpush2.bf16.msra.mxu0 0
        %1347 = vmatprep.subr.bf16.mxu0 0
        %1348 = vmatpush2.bf16.msra.mxu0 0
        %1349 = vmatprep.mubr.bf16.mxu0 0
        %1350 = vmatmul.mubr.bf16.gmra.mxu0 %v1186
        %v1351 = vpop.f32.mrf.mxu0
        %v1352 = vadd.f32 %v1312, %v1351
        %v1353 = vpop.f32.mrf.mxu0
        %v1354 = vpop.f32.mrf.mxu0
        %v1355 = vadd.f32 %v1312, %v1354
        %v1356 = vpop.f32.mrf.mxu0
        %1357 = vmatprep.mubr.bf16.mxu0 0
        %1358 = vmatmul.mubr.bf16.gmra.mxu0 %v1189
        %v1359 = vpop.f32.mrf.mxu0
        %v1360 = vadd.f32 %v1312, %v1359
        %v1361 = vpop.f32.mrf.mxu0
        %v1362 = vpop.f32.mrf.mxu0
        %v1363 = vadd.f32 %v1312, %v1362
        %v1364 = vpop.f32.mrf.mxu0
        %1365 = vmatprep.mubr.bf16.mxu0 0
        %1366 = vmatmul.mubr.bf16.gmra.mxu0 %v1192
        %v1367 = vpop.f32.mrf.mxu0
        %v1368 = vadd.f32 %v1312, %v1367
        %v1369 = vpop.f32.mrf.mxu0
        %v1370 = vpop.f32.mrf.mxu0
        %v1371 = vadd.f32 %v1312, %v1370
        %v1372 = vpop.f32.mrf.mxu0
        %1373 = vmatprep.mubr.bf16.mxu0 0
        %1374 = vmatmul.mubr.bf16.gmra.mxu0 %v1195
        %v1375 = vpop.f32.mrf.mxu0
        %v1376 = vadd.f32 %v1312, %v1375
        %v1377 = vpop.f32.mrf.mxu0
        %v1378 = vpop.f32.mrf.mxu0
        %v1379 = vadd.f32 %v1312, %v1378
        %v1380 = vpop.f32.mrf.mxu0
        %1381 = vdwg.mxu0
        %v1382 = vld [vmem:[%s11] sm:$0xf]
        %v1383 = vld [vmem:[%s12] sm:$0x1]
        %v1385 = vlaneseq
        %v1386 = vshrl.u32 %v1385, 7
        %v1387 = vsub.s32 0, %v1386
        %v1388 = vrot.slane %v1383, %v1387
        %v1391 = vsel %vm806, %v1382, 0
        %1393 = vmatprep.subr.bf16.mxu0 0
        %1394 = vmatpush1.bf16.msra.mxu0 0
        %1395 = vmatprep.subr.bf16.mxu0 0
        %1396 = vmatpush1.bf16.msra.mxu0 0
        %1397 = vmatprep.subr.bf16.mxu0 0
        %1398 = vmatpush1.bf16.msra.mxu0 0
        %1399 = vmatprep.subr.bf16.mxu0 0
        %1400 = vmatpush1.bf16.msra.mxu0 0
        %1401 = vmatprep.subr.bf16.mxu0 0
        %1402 = vmatpush1.bf16.msra.mxu0 0
        %1403 = vmatprep.subr.bf16.mxu0 0
        %1404 = vmatpush1.bf16.msra.mxu0 0
        %1405 = vmatprep.subr.bf16.mxu0 0
        %1406 = vmatpush1.bf16.msra.mxu0 0
        %1407 = vmatprep.subr.bf16.mxu0 0
        %1408 = vmatpush1.bf16.msra.mxu0 %v1391
        %1409 = vmatprep.subr.bf16.mxu0 0
        %1410 = vmatpush2.bf16.msra.mxu0 0
        %1411 = vmatprep.subr.bf16.mxu0 0
        %1412 = vmatpush2.bf16.msra.mxu0 0
        %1413 = vmatprep.subr.bf16.mxu0 0
        %1414 = vmatpush2.bf16.msra.mxu0 0
        %1415 = vmatprep.subr.bf16.mxu0 0
        %1416 = vmatpush2.bf16.msra.mxu0 0
        %1417 = vmatprep.subr.bf16.mxu0 0
        %1418 = vmatpush2.bf16.msra.mxu0 0
        %1419 = vmatprep.subr.bf16.mxu0 0
        %1420 = vmatpush2.bf16.msra.mxu0 0
        %1421 = vmatprep.subr.bf16.mxu0 0
        %1422 = vmatpush2.bf16.msra.mxu0 0
        %1423 = vmatprep.subr.bf16.mxu0 0
        %1424 = vmatpush2.bf16.msra.mxu0 0
        %1425 = vmatprep.mubr.bf16.mxu0 0
        %1426 = vmatmul.mubr.bf16.gmra.mxu0 %v1186
        %v1427 = vpop.f32.mrf.mxu0
        %v1428 = vadd.f32 %v1388, %v1427
        %v1429 = vpop.f32.mrf.mxu0
        %v1430 = vpop.f32.mrf.mxu0
        %v1431 = vadd.f32 %v1388, %v1430
        %v1432 = vpop.f32.mrf.mxu0
        %1433 = vmatprep.mubr.bf16.mxu0 0
        %1434 = vmatmul.mubr.bf16.gmra.mxu0 %v1189
        %v1435 = vpop.f32.mrf.mxu0
        %v1436 = vadd.f32 %v1388, %v1435
        %v1437 = vpop.f32.mrf.mxu0
        %v1438 = vpop.f32.mrf.mxu0
        %v1439 = vadd.f32 %v1388, %v1438
        %v1440 = vpop.f32.mrf.mxu0
        %1441 = vmatprep.mubr.bf16.mxu0 0
        %1442 = vmatmul.mubr.bf16.gmra.mxu0 %v1192
        %v1443 = vpop.f32.mrf.mxu0
        %v1444 = vadd.f32 %v1388, %v1443
        %v1445 = vpop.f32.mrf.mxu0
        %v1446 = vpop.f32.mrf.mxu0
        %v1447 = vadd.f32 %v1388, %v1446
        %v1448 = vpop.f32.mrf.mxu0
        %1449 = vmatprep.mubr.bf16.mxu0 0
        %1450 = vmatmul.mubr.bf16.gmra.mxu0 %v1195
        %v1451 = vpop.f32.mrf.mxu0
        %v1452 = vadd.f32 %v1388, %v1451
        %v1453 = vpop.f32.mrf.mxu0
        %v1454 = vpop.f32.mrf.mxu0
        %v1455 = vadd.f32 %v1388, %v1454
        %v1456 = vpop.f32.mrf.mxu0
        %1457 = vdwg.mxu0
        %v1458 = vpack.c.bf16 %v1355, %v1352
        %v1459 = vpack.c.bf16 %v1363, %v1360
        %v1460 = vpack.c.bf16 %v1371, %v1368
        %v1461 = vpack.c.bf16 %v1379, %v1376
        %v1462 = vpack.c.bf16 %v1431, %v1428
        %v1463 = vpack.c.bf16 %v1439, %v1436
        %v1464 = vpack.c.bf16 %v1447, %v1444
        %v1465 = vpack.c.bf16 %v1455, %v1452
        %1470 = vrot.lane.b32.xlu0 %v1462, 8
        %v1471 = vpop.permute.xlu0 %1470
        %1472 = vrot.lane.b32.xlu0 %v1463, 8
        %v1473 = vpop.permute.xlu0 %1472
        %1474 = vrot.lane.b32.xlu0 %v1464, 8
        %v1475 = vpop.permute.xlu0 %1474
        %1476 = vrot.lane.b32.xlu0 %v1465, 8
        %v1477 = vpop.permute.xlu0 %1476
        %v1480 = vsel %vm650, %v1458, %v1471
        %v1483 = vsel %vm650, %v1459, %v1473
        %v1486 = vsel %vm650, %v1460, %v1475
        %v1489 = vsel %vm650, %v1461, %v1477
        %v1494 = vunpack.c.l.b16 %v1480
        %v1495 = vunpack.c.h.b16 %v1480
        %v1496 = vunpack.c.l.b16 %v1483
        %v1497 = vunpack.c.h.b16 %v1483
        %v1498 = vunpack.c.l.b16 %v1486
        %v1499 = vunpack.c.h.b16 %v1486
        %v1500 = vunpack.c.l.b16 %v1489
        %v1501 = vunpack.c.h.b16 %v1489
        %v1502 = vpack.c.b16 %v1494, %v1494
        %v1503 = vpack.c.b16 %v1495, %v1495
        %v1504 = vpack.c.b16 %v1496, %v1496
        %v1505 = vpack.c.b16 %v1497, %v1497
        %v1506 = vpack.c.b16 %v1498, %v1498
        %v1507 = vpack.c.b16 %v1499, %v1499
        %v1508 = vpack.c.b16 %v1500, %v1500
        %v1509 = vpack.c.b16 %v1501, %v1501
        %vm1518 = vcmask 125952
        %1519 = vst.msk [vmem:[%s608] sm:$0xf] %vm1518, %v1502
        %1520 = vst.msk [vmem:[%s608 + $0x4] sm:$0xf] %vm1518, %v1503
        %1521 = vst.msk [vmem:[%s608 + $0x8] sm:$0xf] %vm1518, %v1504
        %1522 = vst.msk [vmem:[%s608 + $0xc] sm:$0xf] %vm1518, %v1505
        %1523 = vst.msk [vmem:[%s608 + $0x10] sm:$0xf] %vm1518, %v1506
        %1524 = vst.msk [vmem:[%s608 + $0x14] sm:$0xf] %vm1518, %v1507
        %1525 = vst.msk [vmem:[%s608 + $0x18] sm:$0xf] %vm1518, %v1508
        %1526 = vst.msk [vmem:[%s608 + $0x1c] sm:$0xf] %vm1518, %v1509
        %s1527 = smul.u32 8, %s37
        %p1528 = scmp.lt.s32.totalorder %s36, 1
        %s1529 = scalar_select %p1528, %s36, 1
        %p1530 = scmp.lt.s32.totalorder %s1527, 7
        %s1531 = scalar_select %p1530, %s1527, 7
        %s1532 = smul.addr %s1529, 8
        %s1533 = sadd.s32 %s1531, %s1532
        %s1534 = smul.addr %s1533, 4
        %s1535 = scalar_lea.vmem %s13, %s1534
        %s1536 = smul.u32 8, %s37
        %p1537 = scmp.lt.s32.totalorder %s36, 1
        %s1538 = scalar_select %p1537, %s36, 1
        %p1539 = scmp.lt.s32.totalorder %s1536, 7
        %s1540 = scalar_select %p1539, %s1536, 7
        %s1541 = smul.addr %s1538, 8
        %s1542 = sadd.s32 %s1540, %s1541
        %s1543 = smul.addr %s1542, 4
        %s1544 = scalar_lea.vmem %s14, %s1543
        // Predicated region
        $region101: #{tpu_custom_call.1} parent=71 // pred_check
          %p1545 = pneg %p344
        $region102: #{tpu_custom_call.1} parent=71 // pred_check_branch
          %1547 = sbr.rel (%p1545) target = $region104
        $region103: #{tpu_custom_call.1} parent=71 // pred_region
          %s1548 = smul.u32 8, %s37
        $region104: #{tpu_custom_call.1} parent=71 // pred_fallthru
          _
        // Predicated region
        $region105: #{tpu_custom_call.1} parent=71 // pred_check
          %p1549 = pneg %p372
        $region106: #{tpu_custom_call.1} parent=71 // pred_check_branch
          %1551 = sbr.rel (%p1549) target = $region108
        $region107: #{tpu_custom_call.1} parent=71 // pred_region
          %s1552 = smul.u32 8, %s37
        $region108: #{tpu_custom_call.1} parent=71 // pred_fallthru
          _
      $region72: #{tpu_custom_call.1} parent=5 // pred_fallthru
        _
      %p1553 = scmp.le.s32.totalorder 2, %s27
      // Predicated region
      $region109: #{tpu_custom_call.1} parent=5 // pred_check
        %p1554 = pneg %p1553
      $region110: #{tpu_custom_call.1} parent=5 // pred_check_branch
        %1556 = sbr.rel (%p1554) target = $region112
      $region111: #{tpu_custom_call.1} parent=5 // pred_region
        %s1557 = ssub.s32 %s27, 2
        // Predicated region
        $region113: #{tpu_custom_call.1} parent=111 // pred_check
          %p1558 = pneg %p350
        $region114: #{tpu_custom_call.1} parent=111 // pred_check_branch
          %1560 = sbr.rel (%p1558) target = $region116
        $region115: #{tpu_custom_call.1} parent=111 // pred_region
          %s1561 = smul.u32 8, %s39
          %p1562 = scmp.lt.s32.totalorder %s38, 1
          %s1563 = scalar_select %p1562, %s38, 1
          %p1564 = scmp.lt.s32.totalorder %s1561, 7
          %s1565 = scalar_select %p1564, %s1561, 7
          %s1566 = smul.addr %s1563, 8
          %s1567 = sadd.s32 %s1565, %s1566
          %s1568 = smul.addr %s1567, 4
          %s1569 = scalar_lea.vmem %s13, %s1568
        $region116: #{tpu_custom_call.1} parent=111 // pred_fallthru
          _
        // Predicated region
        $region117: #{tpu_custom_call.1} parent=111 // pred_check
          %p1570 = pneg %p378
        $region118: #{tpu_custom_call.1} parent=111 // pred_check_branch
          %1572 = sbr.rel (%p1570) target = $region120
        $region119: #{tpu_custom_call.1} parent=111 // pred_region
          %s1573 = smul.u32 8, %s39
          %p1574 = scmp.lt.s32.totalorder %s38, 1
          %s1575 = scalar_select %p1574, %s38, 1
          %p1576 = scmp.lt.s32.totalorder %s1573, 7
          %s1577 = scalar_select %p1576, %s1573, 7
          %s1578 = smul.addr %s1575, 8
          %s1579 = sadd.s32 %s1577, %s1578
          %s1580 = smul.addr %s1579, 4
          %s1581 = scalar_lea.vmem %s14, %s1580
        $region120: #{tpu_custom_call.1} parent=111 // pred_fallthru
          _
      $region112: #{tpu_custom_call.1} parent=5 // pred_fallthru
        _
    $region6: #{tpu_custom_call.1} parent=1 // loop_footer
      %s31 = sadd.s32 1, %s27
    $region7: #{tpu_custom_call.1} parent=1 // loop_footer_branch
      %26 = sbr.rel target = $region3
    $region8: #{tpu_custom_call.1} parent=1 // loop_exit
      _
    %1582 = vsyncpa [#allocation3], 1
    %s1583 = scalar_lea.sflag [#allocation3], 1
    %1584 = vsyncpa %s1583, 1
    %1585 = vsyncpa [#allocation5], 1
    %1586 = vsyncpa [#allocation8], 1
    %1587 = vsyncpa [#allocation11], 1

</llo_original>
